<compile_context>
chip_gen: v5e
topology: v5e:2x2
jax: 0.10.0
libtpu: 0.0.40
codegen_flags: <defaults>
</compile_context>

<pallas_src>
import functools

import jax
import jax.numpy as jnp
import numpy as np
from jax.experimental import pallas as pl
from jax.experimental.pallas import tpu as pltpu

_HIDDEN = (512, 512, 256, 128)
_LANE = 128


def _round_up(x, m):
    return (x + m - 1) // m * m


def _cdiv(a, b):
    return -(-a // b)


def modelj_kernel(x_ref, w1_ref, w2_ref, w3_ref, w4_ref, w5_ref, b_ref, o_ref,
                  *, bias_offsets):
    """Fused 5-layer MLP forward for one batch tile.

    x_ref : (TILE_B, in_pad)   f32 activations, batch on sublanes, lane-dense
    w_i   : (fan_in, fan_out)  bf16, so the kernel computes x @ W + b
    b_ref : (1, sum(fan_outs)) f32 packed biases (single DMA descriptor)
    o_ref : (TILE_B, out_pad)  f32, lane-dense (out padded to multiple of 128)
    """
    o0, o1, o2, o3, o4, o5 = bias_offsets
    cdt = w1_ref.dtype  # bf16 compute dtype; accumulate in f32 on the MXU

    h = x_ref[...].astype(cdt)
    h = jnp.maximum(
        jnp.dot(h, w1_ref[...], preferred_element_type=jnp.float32)
        + b_ref[:, o0:o1], 0.0).astype(cdt)
    h = jnp.maximum(
        jnp.dot(h, w2_ref[...], preferred_element_type=jnp.float32)
        + b_ref[:, o1:o2], 0.0).astype(cdt)
    h = jnp.maximum(
        jnp.dot(h, w3_ref[...], preferred_element_type=jnp.float32)
        + b_ref[:, o2:o3], 0.0).astype(cdt)
    h = jnp.maximum(
        jnp.dot(h, w4_ref[...], preferred_element_type=jnp.float32)
        + b_ref[:, o3:o4], 0.0).astype(cdt)
    out = (jnp.dot(h, w5_ref[...], preferred_element_type=jnp.float32)
           + b_ref[:, o4:o5])
    o_ref[...] = out.astype(o_ref.dtype)


def pack_params(params, input_dim, output_dim, compute_dtype=jnp.bfloat16):
    """One-time packing (normally done at model-load time):
       - zero-pad w1's fan_in 90 -> 128 so the x tile is lane-dense,
       - zero-pad the final layer's weight/bias to a multiple of 128 lanes so
         the output store is an unmasked lane-dense vst,
       - concatenate the 5 biases into one (1, total) f32 array (single DMA),
       - cast weights to bf16 (f32 accumulation happens in-kernel)."""
    in_pad = _round_up(input_dim, _LANE)
    out_pad = _round_up(output_dim, _LANE)

    w1 = params["w1"]
    w1p = jnp.zeros((in_pad, w1.shape[1]), w1.dtype).at[:input_dim, :].set(w1)

    w5, b5 = params["w5"], params["b5"]
    w5p = jnp.zeros((w5.shape[0], out_pad), w5.dtype).at[:, :output_dim].set(w5)
    b5p = jnp.zeros((1, out_pad), b5.dtype).at[:, :output_dim].set(b5)

    biases = [params["b1"], params["b2"], params["b3"], params["b4"], b5p]
    bpack = jnp.concatenate(biases, axis=1).astype(jnp.float32)
    widths = tuple(b.shape[1] for b in biases)                 # (512,512,256,128,128)
    offsets = tuple(int(v) for v in np.cumsum((0,) + widths))  # static, 128-aligned

    packed = dict(
        w1=w1p.astype(compute_dtype),
        w2=params["w2"].astype(compute_dtype),
        w3=params["w3"].astype(compute_dtype),
        w4=params["w4"].astype(compute_dtype),
        w5=w5p.astype(compute_dtype),
        bpack=bpack,
    )
    return packed, offsets, in_pad, out_pad


def _choose_tile_b(B, tile_b):
    """Balanced batch tile: multiple of 8, capped at tile_b, and >= 2 grid
    programs once B >= 256 so the 'parallel' axis actually splits across
    v7x's two TensorCores."""
    n_tiles = max(1, _cdiv(B, tile_b))
    if B >= 256 and n_tiles < 2:
        n_tiles = 2
    return _round_up(_cdiv(B, n_tiles), 8)


def modelj_forward(x, packed, bias_offsets, in_pad, out_pad, output_dim, *,
                   tile_b=1024):
    B, in_dim = x.shape

    tb = _choose_tile_b(B, tile_b)
    b_padded = _round_up(B, tb)
    if b_padded != B or in_pad != in_dim:
        x = jnp.zeros((b_padded, in_pad), x.dtype).at[:B, :in_dim].set(x)

    grid = (b_padded // tb,)

    batch2d = lambda i: (i, 0)   # x / output: walk the batch tiles
    const2d = lambda i: (0, 0)   # weights / packed bias: resident across tiles

    out = pl.pallas_call(
        functools.partial(modelj_kernel, bias_offsets=bias_offsets),
        out_shape=jax.ShapeDtypeStruct((b_padded, out_pad), jnp.float32),
        grid=grid,
        in_specs=[
            pl.BlockSpec((tb, in_pad), batch2d),
            pl.BlockSpec(packed["w1"].shape, const2d),
            pl.BlockSpec(packed["w2"].shape, const2d),
            pl.BlockSpec(packed["w3"].shape, const2d),
            pl.BlockSpec(packed["w4"].shape, const2d),
            pl.BlockSpec(packed["w5"].shape, const2d),
            pl.BlockSpec(packed["bpack"].shape, const2d),
        ],
        out_specs=pl.BlockSpec((tb, out_pad), batch2d),
        compiler_params=pltpu.CompilerParams(
            dimension_semantics=("parallel",)),
    )(x, packed["w1"], packed["w2"], packed["w3"], packed["w4"],
      packed["w5"], packed["bpack"])

    return out[:B, :output_dim]


def init_params(key, input_dim=90, output_dim=10):
    """torch.nn.Linear-style default init (uniform +-1/sqrt(fan_in)).
    Weights stored as [fan_in, fan_out] (transpose of torch's [out, in])."""
    dims = (input_dim,) + _HIDDEN + (output_dim,)
    keys = jax.random.split(key, 2 * (len(dims) - 1))
    params = {}
    for li in range(len(dims) - 1):
        fan_in, fan_out = dims[li], dims[li + 1]
        bound = 1.0 / float(np.sqrt(fan_in))
        kw, kb = keys[2 * li], keys[2 * li + 1]
        params[f"w{li + 1}"] = jax.random.uniform(
            kw, (fan_in, fan_out), jnp.float32, -bound, bound)
        params[f"b{li + 1}"] = jax.random.uniform(
            kb, (1, fan_out), jnp.float32, -bound, bound)
    return params


def reference_forward(x, p):
    h = x
    for li in range(1, 5):
        h = jnp.maximum(h @ p[f"w{li}"] + p[f"b{li}"], 0.0)
    return h @ p["w5"] + p["b5"]


if __name__ == "__main__":
    key = jax.random.PRNGKey(0)
    kx, kp = jax.random.split(key)

    B, input_dim, output_dim = 8, 90, 10
    x = jax.random.normal(kx, (B, input_dim), jnp.float32)
    params = init_params(kp, input_dim, output_dim)

    packed, bias_offsets, in_pad, out_pad = pack_params(
        params, input_dim, output_dim)

    out = modelj_forward(x, packed, bias_offsets, in_pad, out_pad, output_dim)
    out = jax.block_until_ready(out)

    ref = reference_forward(x, params)
    assert out.shape == (B, output_dim)
    # bf16 weights/activations with f32 accumulation: deliberate deviation from
    # PyTorch fp32 semantics -> looser tolerance vs. the fp32 reference.
    assert jnp.allclose(out, ref, atol=2e-2, rtol=2e-2), \
        f"mismatch vs pure-JAX reference (max abs diff {jnp.max(jnp.abs(out - ref))})"

    print("KERNEL_OK")
</pallas_src>

<mosaic_0001>
module attributes {stable_mosaic.version = 11 : i64} {
  func.func @modelj_kernel(%arg0: i32, %arg1: memref<8x128xf32, #tpu.memory_space<vmem>>, %arg2: memref<128x512xbf16, #tpu.memory_space<vmem>>, %arg3: memref<512x512xbf16, #tpu.memory_space<vmem>>, %arg4: memref<512x256xbf16, #tpu.memory_space<vmem>>, %arg5: memref<256x128xbf16, #tpu.memory_space<vmem>>, %arg6: memref<128x128xbf16, #tpu.memory_space<vmem>>, %arg7: memref<1x1536xf32, #tpu.memory_space<vmem>>, %arg8: memref<8x128xf32, #tpu.memory_space<vmem>>) attributes {dimension_semantics = [#tpu.dimension_semantics<parallel>], iteration_bounds = array<i64: 1>, scalar_prefetch = 0 : i64, scratch_operands = 0 : i64, tpu.core_type = #tpu.core_type<tc>, window_params = [{transform_indices = @transform_0, window_bounds = array<i64: 8, 128>}, {pipeline_mode = #tpu.pipeline_mode<synchronous>, transform_indices = @transform_1, window_bounds = array<i64: 128, 512>}, {pipeline_mode = #tpu.pipeline_mode<synchronous>, transform_indices = @transform_2, window_bounds = array<i64: 512, 512>}, {pipeline_mode = #tpu.pipeline_mode<synchronous>, transform_indices = @transform_3, window_bounds = array<i64: 512, 256>}, {pipeline_mode = #tpu.pipeline_mode<synchronous>, transform_indices = @transform_4, window_bounds = array<i64: 256, 128>}, {pipeline_mode = #tpu.pipeline_mode<synchronous>, transform_indices = @transform_5, window_bounds = array<i64: 128, 128>}, {pipeline_mode = #tpu.pipeline_mode<synchronous>, transform_indices = @transform_6, window_bounds = array<i64: 1, 1536>}, {transform_indices = @transform_7, window_bounds = array<i64: 8, 128>}]} {
    %c0 = arith.constant 0 : index
    %c0_0 = arith.constant 0 : index
    %0 = vector.load %arg1[%c0, %c0_0] : memref<8x128xf32, #tpu.memory_space<vmem>>, vector<8x128xf32>
    %1 = arith.truncf %0 : vector<8x128xf32> to vector<8x128xbf16>
    %c0_1 = arith.constant 0 : index
    %c0_2 = arith.constant 0 : index
    %2 = vector.load %arg2[%c0_1, %c0_2] : memref<128x512xbf16, #tpu.memory_space<vmem>>, vector<128x512xbf16>
    %cst = arith.constant dense<0.000000e+00> : vector<8x512xf32>
    %3 = tpu.matmul %1, %2, %cst {dimension_numbers = #tpu.dot_dimension_numbers<[1], [0], [0], [1], [0, 0, 1, 1], [], []>} : vector<8x128xbf16>, vector<128x512xbf16>, vector<8x512xf32> -> vector<8x512xf32>
    %c0_3 = arith.constant 0 : index
    %c0_4 = arith.constant 0 : index
    %4 = vector.load %arg7[%c0_3, %c0_4] : memref<1x1536xf32, #tpu.memory_space<vmem>>, vector<1x512xf32>
    %5 = vector.broadcast %4 : vector<1x512xf32> to vector<8x512xf32>
    %6 = arith.addf %3, %5 : vector<8x512xf32>
    %cst_5 = arith.constant 0.000000e+00 : f32
    %7 = vector.broadcast %cst_5 : f32 to vector<8x512xf32>
    %8 = arith.maximumf %6, %7 : vector<8x512xf32>
    %9 = arith.truncf %8 : vector<8x512xf32> to vector<8x512xbf16>
    %c0_6 = arith.constant 0 : index
    %c0_7 = arith.constant 0 : index
    %10 = vector.load %arg3[%c0_6, %c0_7] : memref<512x512xbf16, #tpu.memory_space<vmem>>, vector<512x512xbf16>
    %cst_8 = arith.constant dense<0.000000e+00> : vector<8x512xf32>
    %11 = tpu.matmul %9, %10, %cst_8 {dimension_numbers = #tpu.dot_dimension_numbers<[1], [0], [0], [1], [0, 0, 1, 1], [], []>} : vector<8x512xbf16>, vector<512x512xbf16>, vector<8x512xf32> -> vector<8x512xf32>
    %c0_9 = arith.constant 0 : index
    %c512 = arith.constant 512 : index
    %12 = vector.load %arg7[%c0_9, %c512] : memref<1x1536xf32, #tpu.memory_space<vmem>>, vector<1x512xf32>
    %13 = vector.broadcast %12 : vector<1x512xf32> to vector<8x512xf32>
    %14 = arith.addf %11, %13 : vector<8x512xf32>
    %cst_10 = arith.constant 0.000000e+00 : f32
    %15 = vector.broadcast %cst_10 : f32 to vector<8x512xf32>
    %16 = arith.maximumf %14, %15 : vector<8x512xf32>
    %17 = arith.truncf %16 : vector<8x512xf32> to vector<8x512xbf16>
    %c0_11 = arith.constant 0 : index
    %c0_12 = arith.constant 0 : index
    %18 = vector.load %arg4[%c0_11, %c0_12] : memref<512x256xbf16, #tpu.memory_space<vmem>>, vector<512x256xbf16>
    %cst_13 = arith.constant dense<0.000000e+00> : vector<8x256xf32>
    %19 = tpu.matmul %17, %18, %cst_13 {dimension_numbers = #tpu.dot_dimension_numbers<[1], [0], [0], [1], [0, 0, 1, 1], [], []>} : vector<8x512xbf16>, vector<512x256xbf16>, vector<8x256xf32> -> vector<8x256xf32>
    %c0_14 = arith.constant 0 : index
    %c1024 = arith.constant 1024 : index
    %20 = vector.load %arg7[%c0_14, %c1024] : memref<1x1536xf32, #tpu.memory_space<vmem>>, vector<1x256xf32>
    %21 = vector.broadcast %20 : vector<1x256xf32> to vector<8x256xf32>
    %22 = arith.addf %19, %21 : vector<8x256xf32>
    %cst_15 = arith.constant 0.000000e+00 : f32
    %23 = vector.broadcast %cst_15 : f32 to vector<8x256xf32>
    %24 = arith.maximumf %22, %23 : vector<8x256xf32>
    %25 = arith.truncf %24 : vector<8x256xf32> to vector<8x256xbf16>
    %c0_16 = arith.constant 0 : index
    %c0_17 = arith.constant 0 : index
    %26 = vector.load %arg5[%c0_16, %c0_17] : memref<256x128xbf16, #tpu.memory_space<vmem>>, vector<256x128xbf16>
    %cst_18 = arith.constant dense<0.000000e+00> : vector<8x128xf32>
    %27 = tpu.matmul %25, %26, %cst_18 {dimension_numbers = #tpu.dot_dimension_numbers<[1], [0], [0], [1], [0, 0, 1, 1], [], []>} : vector<8x256xbf16>, vector<256x128xbf16>, vector<8x128xf32> -> vector<8x128xf32>
    %c0_19 = arith.constant 0 : index
    %c1280 = arith.constant 1280 : index
    %28 = vector.load %arg7[%c0_19, %c1280] : memref<1x1536xf32, #tpu.memory_space<vmem>>, vector<1x128xf32>
    %29 = vector.broadcast %28 : vector<1x128xf32> to vector<8x128xf32>
    %30 = arith.addf %27, %29 : vector<8x128xf32>
    %cst_20 = arith.constant 0.000000e+00 : f32
    %31 = vector.broadcast %cst_20 : f32 to vector<8x128xf32>
    %32 = arith.maximumf %30, %31 : vector<8x128xf32>
    %33 = arith.truncf %32 : vector<8x128xf32> to vector<8x128xbf16>
    %c0_21 = arith.constant 0 : index
    %c0_22 = arith.constant 0 : index
    %34 = vector.load %arg6[%c0_21, %c0_22] : memref<128x128xbf16, #tpu.memory_space<vmem>>, vector<128x128xbf16>
    %cst_23 = arith.constant dense<0.000000e+00> : vector<8x128xf32>
    %35 = tpu.matmul %33, %34, %cst_23 {dimension_numbers = #tpu.dot_dimension_numbers<[1], [0], [0], [1], [0, 0, 1, 1], [], []>} : vector<8x128xbf16>, vector<128x128xbf16>, vector<8x128xf32> -> vector<8x128xf32>
    %c0_24 = arith.constant 0 : index
    %c1408 = arith.constant 1408 : index
    %36 = vector.load %arg7[%c0_24, %c1408] : memref<1x1536xf32, #tpu.memory_space<vmem>>, vector<1x128xf32>
    %37 = vector.broadcast %36 : vector<1x128xf32> to vector<8x128xf32>
    %38 = arith.addf %35, %37 : vector<8x128xf32>
    %c0_25 = arith.constant 0 : index
    %c0_26 = arith.constant 0 : index
    %39 = vector.load %arg8[%c0_25, %c0_26] : memref<8x128xf32, #tpu.memory_space<vmem>>, vector<8x128xf32>
    tpu.vector_store %arg8[%c0_25, %c0_26], %38 {strides = array<i32>} : memref<8x128xf32, #tpu.memory_space<vmem>>, vector<8x128xf32>,
    return
  }
  func.func @transform_0(%arg0: i32) -> (i32, i32) {
    %c0_i32 = arith.constant 0 : i32
    %c0_i32_0 = arith.constant 0 : i32
    return %arg0, %c0_i32 : i32, i32
  }
  func.func @transform_1(%arg0: i32) -> (i32, i32) {
    %c0_i32 = arith.constant 0 : i32
    %c0_i32_0 = arith.constant 0 : i32
    %c0_i32_1 = arith.constant 0 : i32
    return %c0_i32, %c0_i32_0 : i32, i32
  }
  func.func @transform_2(%arg0: i32) -> (i32, i32) {
    %c0_i32 = arith.constant 0 : i32
    %c0_i32_0 = arith.constant 0 : i32
    %c0_i32_1 = arith.constant 0 : i32
    return %c0_i32, %c0_i32_0 : i32, i32
  }
  func.func @transform_3(%arg0: i32) -> (i32, i32) {
    %c0_i32 = arith.constant 0 : i32
    %c0_i32_0 = arith.constant 0 : i32
    %c0_i32_1 = arith.constant 0 : i32
    return %c0_i32, %c0_i32_0 : i32, i32
  }
  func.func @transform_4(%arg0: i32) -> (i32, i32) {
    %c0_i32 = arith.constant 0 : i32
    %c0_i32_0 = arith.constant 0 : i32
    %c0_i32_1 = arith.constant 0 : i32
    return %c0_i32, %c0_i32_0 : i32, i32
  }
  func.func @transform_5(%arg0: i32) -> (i32, i32) {
    %c0_i32 = arith.constant 0 : i32
    %c0_i32_0 = arith.constant 0 : i32
    %c0_i32_1 = arith.constant 0 : i32
    return %c0_i32, %c0_i32_0 : i32, i32
  }
  func.func @transform_6(%arg0: i32) -> (i32, i32) {
    %c0_i32 = arith.constant 0 : i32
    %c0_i32_0 = arith.constant 0 : i32
    %c0_i32_1 = arith.constant 0 : i32
    return %c0_i32, %c0_i32_0 : i32, i32
  }
  func.func @transform_7(%arg0: i32) -> (i32, i32) {
    %c0_i32 = arith.constant 0 : i32
    %c0_i32_0 = arith.constant 0 : i32
    return %arg0, %c0_i32 : i32, i32
  }
}

</mosaic_0001>

<llo_original>
// kernel: tpu_custom_call.1
$region0: #{tpu_custom_call.1}
  #allocation0 [shape = 'u32[]', space=smem, size = 0x4, offset = 0x4, fixed_abs, tag = 'smem constant byte address 0x4 - core index']
  #allocation1 [shape = 'u32[72,128]{1,0:T(1,128)}', space=vmem, size = 0x9000, scoped, tag = 'internal scratch']
  %s0 = inlined_call_operand.hbm [shape: f32[8,128], index: 0, kind: input, shape index: {}]
  %s1 = inlined_call_operand.hbm [shape: bf16[128,512], index: 1, kind: input, shape index: {}]
  %s2 = inlined_call_operand.hbm [shape: bf16[512,512], index: 2, kind: input, shape index: {}]
  %s3 = inlined_call_operand.hbm [shape: bf16[512,256], index: 3, kind: input, shape index: {}]
  %s4 = inlined_call_operand.hbm [shape: bf16[256,128], index: 4, kind: input, shape index: {}]
  %s5 = inlined_call_operand.hbm [shape: bf16[128,128], index: 5, kind: input, shape index: {}]
  %s6 = inlined_call_operand.hbm [shape: f32[1,1536], index: 6, kind: input, shape index: {}]
  %s7 = inlined_call_operand.hbm [shape: f32[8,128], index: 7, kind: output, shape index: {}]
  %s8 = sld [smem:[#allocation0]]
  $region66: #{tpu_custom_call.1} parent=0
    _
  %s10 = ssub.s32 1, %s8
  %s11 = scalar_select 0, %s10, %s8
  $region1: #{tpu_custom_call.1} parent=0
    #allocation2 [shape = 'u8[4096]{0}', space=vmem, size = 0x1000, scoped, tag = 'input window, operand 0, single buffered']
    #allocation3 [shape = 's32[1]{0}', space=sflag, size = 0x4, scoped, tag = 'scoped memory for tpu_custom_call.1']
    #allocation4 [shape = 's32[1]{0}', space=sflag, size = 0x4, scoped, tag = 'scoped memory for tpu_custom_call.1']
    #allocation5 [shape = 'u8[131072]{0}', space=vmem, size = 0x20000, scoped, tag = 'input window, operand 1, single buffered']
    #allocation6 [shape = 's32[1]{0}', space=sflag, size = 0x4, scoped, tag = 'scoped memory for tpu_custom_call.1']
    #allocation7 [shape = 'u8[524288]{0}', space=vmem, size = 0x80000, scoped, tag = 'input window, operand 2, single buffered']
    #allocation8 [shape = 'u8[262144]{0}', space=vmem, size = 0x40000, scoped, tag = 'input window, operand 3, single buffered']
    #allocation9 [shape = 's32[1]{0}', space=sflag, size = 0x4, scoped, tag = 'scoped memory for tpu_custom_call.1']
    #allocation10 [shape = 'u8[65536]{0}', space=vmem, size = 0x10000, scoped, tag = 'input window, operand 4, single buffered']
    #allocation11 [shape = 'u8[32768]{0}', space=vmem, size = 0x8000, scoped, tag = 'input window, operand 5, single buffered']
    #allocation12 [shape = 's32[1]{0}', space=sflag, size = 0x4, scoped, tag = 'scoped memory for tpu_custom_call.1']
    #allocation13 [shape = 'u8[6144]{0}', space=vmem, size = 0x1800, scoped, tag = 'input window, operand 6, single buffered']
    #allocation14 [shape = 'u8[4096]{0}', space=vmem, size = 0x1000, scoped, tag = 'output window, operand 0, single buffered']
    %12 = vsyncpa [#allocation3], 0
    %13 = vsyncpa [#allocation6], 0
    %14 = vsyncpa [#allocation9], 0
    %15 = vsyncpa [#allocation12], 0
    %16 = vsyncpa [#allocation4], 0
    // Predicated region
    $region2: #{tpu_custom_call.1} parent=1 // pred_check
      _
    $region3: #{tpu_custom_call.1} parent=1 // pred_check_branch
      %18 = sbr.rel (0) target = $region5
    $region4: #{tpu_custom_call.1} parent=1 // pred_region
      %20 = vsyncadd [#allocation3], 0
      %s22 = sshll.u32 %s0, 4
      %s23 = int_to_ptr.hbm [resolvable:$true] %s22
      %s24 = sshll.u32 [#allocation2], 4
      %s25 = int_to_ptr.vmem [resolvable:$true] %s24
      %27 = dma.hbm_to_vmem [thread:$0]  %s23, 128, %s25, [#allocation3]
    $region5: #{tpu_custom_call.1} parent=1 // pred_fallthru
      _
    // Predicated region
    $region6: #{tpu_custom_call.1} parent=1 // pred_check
      _
    $region7: #{tpu_custom_call.1} parent=1 // pred_check_branch
      %29 = sbr.rel (0) target = $region9
    $region8: #{tpu_custom_call.1} parent=1 // pred_region
      %31 = vsyncadd [#allocation6], 0
      %s32 = sshll.u32 %s1, 4
      %s33 = int_to_ptr.hbm [resolvable:$true] %s32
      %s34 = sshll.u32 [#allocation5], 4
      %s35 = int_to_ptr.vmem [resolvable:$true] %s34
      %40 = dma.hbm_to_vmem [thread:$0]  %s33, 4096, %s35, [#allocation6], 256, 256, 16
    $region9: #{tpu_custom_call.1} parent=1 // pred_fallthru
      _
    // Predicated region
    $region10: #{tpu_custom_call.1} parent=1 // pred_check
      _
    $region11: #{tpu_custom_call.1} parent=1 // pred_check_branch
      %42 = sbr.rel (0) target = $region13
    $region12: #{tpu_custom_call.1} parent=1 // pred_region
      %44 = vsyncadd [#allocation6], 0
      %s45 = sshll.u32 %s2, 4
      %s46 = int_to_ptr.hbm [resolvable:$true] %s45
      %s47 = sshll.u32 [#allocation7], 4
      %s48 = int_to_ptr.vmem [resolvable:$true] %s47
      %53 = dma.hbm_to_vmem [thread:$0]  %s46, 16384, %s48, [#allocation6], 256, 256, 16
    $region13: #{tpu_custom_call.1} parent=1 // pred_fallthru
      _
    // Predicated region
    $region14: #{tpu_custom_call.1} parent=1 // pred_check
      _
    $region15: #{tpu_custom_call.1} parent=1 // pred_check_branch
      %55 = sbr.rel (0) target = $region17
    $region16: #{tpu_custom_call.1} parent=1 // pred_region
      %57 = vsyncadd [#allocation9], 0
      %s58 = sshll.u32 %s3, 4
      %s59 = int_to_ptr.hbm [resolvable:$true] %s58
      %s60 = sshll.u32 [#allocation8], 4
      %s61 = int_to_ptr.vmem [resolvable:$true] %s60
      %66 = dma.hbm_to_vmem [thread:$0]  %s59, 8192, %s61, [#allocation9], 128, 128, 8
    $region17: #{tpu_custom_call.1} parent=1 // pred_fallthru
      _
    // Predicated region
    $region18: #{tpu_custom_call.1} parent=1 // pred_check
      _
    $region19: #{tpu_custom_call.1} parent=1 // pred_check_branch
      %68 = sbr.rel (0) target = $region21
    $region20: #{tpu_custom_call.1} parent=1 // pred_region
      %70 = vsyncadd [#allocation9], 0
      %s71 = sshll.u32 %s4, 4
      %s72 = int_to_ptr.hbm [resolvable:$true] %s71
      %s73 = sshll.u32 [#allocation10], 4
      %s74 = int_to_ptr.vmem [resolvable:$true] %s73
      %79 = dma.hbm_to_vmem [thread:$0]  %s72, 2048, %s74, [#allocation9], 64, 64, 4
    $region21: #{tpu_custom_call.1} parent=1 // pred_fallthru
      _
    // Predicated region
    $region22: #{tpu_custom_call.1} parent=1 // pred_check
      _
    $region23: #{tpu_custom_call.1} parent=1 // pred_check_branch
      %81 = sbr.rel (0) target = $region25
    $region24: #{tpu_custom_call.1} parent=1 // pred_region
      %83 = vsyncadd [#allocation12], 0
      %s84 = sshll.u32 %s5, 4
      %s85 = int_to_ptr.hbm [resolvable:$true] %s84
      %s86 = sshll.u32 [#allocation11], 4
      %s87 = int_to_ptr.vmem [resolvable:$true] %s86
      %92 = dma.hbm_to_vmem [thread:$0]  %s85, 1024, %s87, [#allocation12], 64, 64, 4
    $region25: #{tpu_custom_call.1} parent=1 // pred_fallthru
      _
    // Predicated region
    $region26: #{tpu_custom_call.1} parent=1 // pred_check
      _
    $region27: #{tpu_custom_call.1} parent=1 // pred_check_branch
      %94 = sbr.rel (0) target = $region29
    $region28: #{tpu_custom_call.1} parent=1 // pred_region
      %96 = vsyncadd [#allocation12], 0
      %s98 = sshll.u32 %s6, 4
      %s99 = int_to_ptr.hbm [resolvable:$true] %s98
      %s100 = sshll.u32 [#allocation13], 4
      %s101 = int_to_ptr.vmem [resolvable:$true] %s100
      %103 = dma.hbm_to_vmem [thread:$0]  %s99, 192, %s101, [#allocation12]
    $region29: #{tpu_custom_call.1} parent=1 // pred_fallthru
      _
    // Predicated region
    $region30: #{tpu_custom_call.1} parent=1 // pred_check
      _
    $region31: #{tpu_custom_call.1} parent=1 // pred_check_branch
      %105 = sbr.rel (0) target = $region33
    $region32: #{tpu_custom_call.1} parent=1 // pred_region
      %107 = dma.done [#allocation3], 128
    $region33: #{tpu_custom_call.1} parent=1 // pred_fallthru
      _
    // Predicated region
    $region34: #{tpu_custom_call.1} parent=1 // pred_check
      _
    $region35: #{tpu_custom_call.1} parent=1 // pred_check_branch
      %109 = sbr.rel (0) target = $region37
    $region36: #{tpu_custom_call.1} parent=1 // pred_region
      %111 = dma.done [#allocation6], 4096
    $region37: #{tpu_custom_call.1} parent=1 // pred_fallthru
      _
    // Predicated region
    $region38: #{tpu_custom_call.1} parent=1 // pred_check
      _
    $region39: #{tpu_custom_call.1} parent=1 // pred_check_branch
      %113 = sbr.rel (0) target = $region41
    $region40: #{tpu_custom_call.1} parent=1 // pred_region
      %115 = dma.done [#allocation6], 16384
    $region41: #{tpu_custom_call.1} parent=1 // pred_fallthru
      _
    // Predicated region
    $region42: #{tpu_custom_call.1} parent=1 // pred_check
      _
    $region43: #{tpu_custom_call.1} parent=1 // pred_check_branch
      %117 = sbr.rel (0) target = $region45
    $region44: #{tpu_custom_call.1} parent=1 // pred_region
      %119 = dma.done [#allocation9], 8192
    $region45: #{tpu_custom_call.1} parent=1 // pred_fallthru
      _
    // Predicated region
    $region46: #{tpu_custom_call.1} parent=1 // pred_check
      _
    $region47: #{tpu_custom_call.1} parent=1 // pred_check_branch
      %121 = sbr.rel (0) target = $region49
    $region48: #{tpu_custom_call.1} parent=1 // pred_region
      %123 = dma.done [#allocation9], 2048
    $region49: #{tpu_custom_call.1} parent=1 // pred_fallthru
      _
    // Predicated region
    $region50: #{tpu_custom_call.1} parent=1 // pred_check
      _
    $region51: #{tpu_custom_call.1} parent=1 // pred_check_branch
      %125 = sbr.rel (0) target = $region53
    $region52: #{tpu_custom_call.1} parent=1 // pred_region
      %127 = dma.done [#allocation12], 1024
    $region53: #{tpu_custom_call.1} parent=1 // pred_fallthru
      _
    // Predicated region
    $region54: #{tpu_custom_call.1} parent=1 // pred_check
      _
    $region55: #{tpu_custom_call.1} parent=1 // pred_check_branch
      %129 = sbr.rel (0) target = $region57
    $region56: #{tpu_custom_call.1} parent=1 // pred_region
      %131 = dma.done [#allocation12], 192
    $region57: #{tpu_custom_call.1} parent=1 // pred_fallthru
      _
    %v132 = vld [vmem:[#allocation2] sm:$0xff]
    %v133 = vpack.c.bf16 %v132, %v132
    %v134 = vld [vmem:[#allocation5] sm:$0xff]
    %v135 = vld [vmem:[#allocation5 + $0x8] sm:$0xff]
    %v136 = vld [vmem:[#allocation5 + $0x10] sm:$0xff]
    %v137 = vld [vmem:[#allocation5 + $0x18] sm:$0xff]
    %v138 = vld [vmem:[#allocation5 + $0x20] sm:$0xff]
    %v139 = vld [vmem:[#allocation5 + $0x28] sm:$0xff]
    %v140 = vld [vmem:[#allocation5 + $0x30] sm:$0xff]
    %v141 = vld [vmem:[#allocation5 + $0x38] sm:$0xff]
    %v142 = vld [vmem:[#allocation5 + $0x40] sm:$0xff]
    %v143 = vld [vmem:[#allocation5 + $0x48] sm:$0xff]
    %v144 = vld [vmem:[#allocation5 + $0x50] sm:$0xff]
    %v145 = vld [vmem:[#allocation5 + $0x58] sm:$0xff]
    %v146 = vld [vmem:[#allocation5 + $0x60] sm:$0xff]
    %v147 = vld [vmem:[#allocation5 + $0x68] sm:$0xff]
    %v148 = vld [vmem:[#allocation5 + $0x70] sm:$0xff]
    %v149 = vld [vmem:[#allocation5 + $0x78] sm:$0xff]
    %v150 = vld [vmem:[#allocation5 + $0x80] sm:$0xff]
    %v151 = vld [vmem:[#allocation5 + $0x88] sm:$0xff]
    %v152 = vld [vmem:[#allocation5 + $0x90] sm:$0xff]
    %v153 = vld [vmem:[#allocation5 + $0x98] sm:$0xff]
    %v154 = vld [vmem:[#allocation5 + $0xa0] sm:$0xff]
    %v155 = vld [vmem:[#allocation5 + $0xa8] sm:$0xff]
    %v156 = vld [vmem:[#allocation5 + $0xb0] sm:$0xff]
    %v157 = vld [vmem:[#allocation5 + $0xb8] sm:$0xff]
    %v158 = vld [vmem:[#allocation5 + $0xc0] sm:$0xff]
    %v159 = vld [vmem:[#allocation5 + $0xc8] sm:$0xff]
    %v160 = vld [vmem:[#allocation5 + $0xd0] sm:$0xff]
    %v161 = vld [vmem:[#allocation5 + $0xd8] sm:$0xff]
    %v162 = vld [vmem:[#allocation5 + $0xe0] sm:$0xff]
    %v163 = vld [vmem:[#allocation5 + $0xe8] sm:$0xff]
    %v164 = vld [vmem:[#allocation5 + $0xf0] sm:$0xff]
    %v165 = vld [vmem:[#allocation5 + $0xf8] sm:$0xff]
    %v166 = vld [vmem:[#allocation13] sm:$0xf]
    %v168 = vperm.slane %v166, 0
    %v169 = vperm.slane %v166, 1
    %v170 = vperm.slane %v166, 2
    %v171 = vperm.slane %v166, 3
    %v208 = vunpack.c.l.b16 %v134
    %v209 = vunpack.c.h.b16 %v134
    %v210 = vunpack.c.l.b16 %v135
    %v211 = vunpack.c.h.b16 %v135
    %v212 = vunpack.c.l.b16 %v136
    %v213 = vunpack.c.h.b16 %v136
    %v214 = vunpack.c.l.b16 %v137
    %v215 = vunpack.c.h.b16 %v137
    %v216 = vunpack.c.l.b16 %v138
    %v217 = vunpack.c.h.b16 %v138
    %v218 = vunpack.c.l.b16 %v139
    %v219 = vunpack.c.h.b16 %v139
    %v220 = vunpack.c.l.b16 %v140
    %v221 = vunpack.c.h.b16 %v140
    %v222 = vunpack.c.l.b16 %v141
    %v223 = vunpack.c.h.b16 %v141
    %v224 = vunpack.c.l.b16 %v142
    %v225 = vunpack.c.h.b16 %v142
    %v226 = vunpack.c.l.b16 %v143
    %v227 = vunpack.c.h.b16 %v143
    %v228 = vunpack.c.l.b16 %v144
    %v229 = vunpack.c.h.b16 %v144
    %v230 = vunpack.c.l.b16 %v145
    %v231 = vunpack.c.h.b16 %v145
    %v232 = vunpack.c.l.b16 %v146
    %v233 = vunpack.c.h.b16 %v146
    %v234 = vunpack.c.l.b16 %v147
    %v235 = vunpack.c.h.b16 %v147
    %v236 = vunpack.c.l.b16 %v148
    %v237 = vunpack.c.h.b16 %v148
    %v238 = vunpack.c.l.b16 %v149
    %v239 = vunpack.c.h.b16 %v149
    %v240 = vunpack.c.l.b16 %v150
    %v241 = vunpack.c.h.b16 %v150
    %v242 = vunpack.c.l.b16 %v151
    %v243 = vunpack.c.h.b16 %v151
    %v244 = vunpack.c.l.b16 %v152
    %v245 = vunpack.c.h.b16 %v152
    %v246 = vunpack.c.l.b16 %v153
    %v247 = vunpack.c.h.b16 %v153
    %v248 = vunpack.c.l.b16 %v154
    %v249 = vunpack.c.h.b16 %v154
    %v250 = vunpack.c.l.b16 %v155
    %v251 = vunpack.c.h.b16 %v155
    %v252 = vunpack.c.l.b16 %v156
    %v253 = vunpack.c.h.b16 %v156
    %v254 = vunpack.c.l.b16 %v157
    %v255 = vunpack.c.h.b16 %v157
    %v256 = vunpack.c.l.b16 %v158
    %v257 = vunpack.c.h.b16 %v158
    %v258 = vunpack.c.l.b16 %v159
    %v259 = vunpack.c.h.b16 %v159
    %v260 = vunpack.c.l.b16 %v160
    %v261 = vunpack.c.h.b16 %v160
    %v262 = vunpack.c.l.b16 %v161
    %v263 = vunpack.c.h.b16 %v161
    %v264 = vunpack.c.l.b16 %v162
    %v265 = vunpack.c.h.b16 %v162
    %v266 = vunpack.c.l.b16 %v163
    %v267 = vunpack.c.h.b16 %v163
    %v268 = vunpack.c.l.b16 %v164
    %v269 = vunpack.c.h.b16 %v164
    %v270 = vunpack.c.l.b16 %v165
    %v271 = vunpack.c.h.b16 %v165
    %v272 = vpack.c.b16 %v212, %v208
    %v273 = vpack.c.b16 %v213, %v209
    %v274 = vpack.c.b16 %v214, %v210
    %v275 = vpack.c.b16 %v215, %v211
    %v276 = vpack.c.b16 %v220, %v216
    %v277 = vpack.c.b16 %v221, %v217
    %v278 = vpack.c.b16 %v222, %v218
    %v279 = vpack.c.b16 %v223, %v219
    %v280 = vpack.c.b16 %v228, %v224
    %v281 = vpack.c.b16 %v229, %v225
    %v282 = vpack.c.b16 %v230, %v226
    %v283 = vpack.c.b16 %v231, %v227
    %v284 = vpack.c.b16 %v236, %v232
    %v285 = vpack.c.b16 %v237, %v233
    %v286 = vpack.c.b16 %v238, %v234
    %v287 = vpack.c.b16 %v239, %v235
    %v288 = vpack.c.b16 %v244, %v240
    %v289 = vpack.c.b16 %v245, %v241
    %v290 = vpack.c.b16 %v246, %v242
    %v291 = vpack.c.b16 %v247, %v243
    %v292 = vpack.c.b16 %v252, %v248
    %v293 = vpack.c.b16 %v253, %v249
    %v294 = vpack.c.b16 %v254, %v250
    %v295 = vpack.c.b16 %v255, %v251
    %v296 = vpack.c.b16 %v260, %v256
    %v297 = vpack.c.b16 %v261, %v257
    %v298 = vpack.c.b16 %v262, %v258
    %v299 = vpack.c.b16 %v263, %v259
    %v300 = vpack.c.b16 %v268, %v264
    %v301 = vpack.c.b16 %v269, %v265
    %v302 = vpack.c.b16 %v270, %v266
    %v303 = vpack.c.b16 %v271, %v267
    %336 = vmatpush.bf16.msra.mxu0 %v300
    %337 = vmatpush.bf16.msra.mxu0 %v296
    %338 = vmatpush.bf16.msra.mxu0 %v292
    %339 = vmatpush.bf16.msra.mxu0 %v288
    %340 = vmatpush.bf16.msra.mxu0 %v284
    %341 = vmatpush.bf16.msra.mxu0 %v280
    %342 = vmatpush.bf16.msra.mxu0 %v276
    %343 = vmatpush.bf16.msra.mxu0 %v272
    %344 = vmatmul.bf16.gmra.mxu0 %v133
    %v345 = vpop.f32.mrf.mxu0
    %v346 = vadd.f32 %v168, %v345
    %v347 = vpop.f32.mrf.mxu0
    %348 = vdwg.mxu0
    %349 = vmatpush.bf16.msra.mxu0 %v301
    %350 = vmatpush.bf16.msra.mxu0 %v297
    %351 = vmatpush.bf16.msra.mxu0 %v293
    %352 = vmatpush.bf16.msra.mxu0 %v289
    %353 = vmatpush.bf16.msra.mxu0 %v285
    %354 = vmatpush.bf16.msra.mxu0 %v281
    %355 = vmatpush.bf16.msra.mxu0 %v277
    %356 = vmatpush.bf16.msra.mxu0 %v273
    %357 = vmatmul.bf16.gmra.mxu0 %v133
    %v358 = vpop.f32.mrf.mxu0
    %v359 = vadd.f32 %v169, %v358
    %v360 = vpop.f32.mrf.mxu0
    %361 = vdwg.mxu0
    %362 = vmatpush.bf16.msra.mxu0 %v302
    %363 = vmatpush.bf16.msra.mxu0 %v298
    %364 = vmatpush.bf16.msra.mxu0 %v294
    %365 = vmatpush.bf16.msra.mxu0 %v290
    %366 = vmatpush.bf16.msra.mxu0 %v286
    %367 = vmatpush.bf16.msra.mxu0 %v282
    %368 = vmatpush.bf16.msra.mxu0 %v278
    %369 = vmatpush.bf16.msra.mxu0 %v274
    %370 = vmatmul.bf16.gmra.mxu0 %v133
    %v371 = vpop.f32.mrf.mxu0
    %v372 = vadd.f32 %v170, %v371
    %v373 = vpop.f32.mrf.mxu0
    %374 = vdwg.mxu0
    %375 = vmatpush.bf16.msra.mxu0 %v303
    %376 = vmatpush.bf16.msra.mxu0 %v299
    %377 = vmatpush.bf16.msra.mxu0 %v295
    %378 = vmatpush.bf16.msra.mxu0 %v291
    %379 = vmatpush.bf16.msra.mxu0 %v287
    %380 = vmatpush.bf16.msra.mxu0 %v283
    %381 = vmatpush.bf16.msra.mxu0 %v279
    %382 = vmatpush.bf16.msra.mxu0 %v275
    %383 = vmatmul.bf16.gmra.mxu0 %v133
    %v384 = vpop.f32.mrf.mxu0
    %v385 = vadd.f32 %v171, %v384
    %v386 = vpop.f32.mrf.mxu0
    %387 = vdwg.mxu0
    %v388 = vmax.f32 %v346, 0.0
    %v389 = vmax.f32 %v359, 0.0
    %v390 = vmax.f32 %v372, 0.0
    %v391 = vmax.f32 %v385, 0.0
    %v392 = vpack.c.bf16 %v388, %v388
    %v393 = vpack.c.bf16 %v389, %v389
    %v394 = vpack.c.bf16 %v390, %v390
    %v395 = vpack.c.bf16 %v391, %v391
    %v396 = vld [vmem:[#allocation7] sm:$0xff]
    %v397 = vld [vmem:[#allocation7 + $0x8] sm:$0xff]
    %v398 = vld [vmem:[#allocation7 + $0x10] sm:$0xff]
    %v399 = vld [vmem:[#allocation7 + $0x18] sm:$0xff]
    %v400 = vld [vmem:[#allocation7 + $0x20] sm:$0xff]
    %v401 = vld [vmem:[#allocation7 + $0x28] sm:$0xff]
    %v402 = vld [vmem:[#allocation7 + $0x30] sm:$0xff]
    %v403 = vld [vmem:[#allocation7 + $0x38] sm:$0xff]
    %v404 = vld [vmem:[#allocation7 + $0x40] sm:$0xff]
    %v405 = vld [vmem:[#allocation7 + $0x48] sm:$0xff]
    %v406 = vld [vmem:[#allocation7 + $0x50] sm:$0xff]
    %v407 = vld [vmem:[#allocation7 + $0x58] sm:$0xff]
    %v408 = vld [vmem:[#allocation7 + $0x60] sm:$0xff]
    %v409 = vld [vmem:[#allocation7 + $0x68] sm:$0xff]
    %v410 = vld [vmem:[#allocation7 + $0x70] sm:$0xff]
    %v411 = vld [vmem:[#allocation7 + $0x78] sm:$0xff]
    %v412 = vld [vmem:[#allocation7 + $0x80] sm:$0xff]
    %v413 = vld [vmem:[#allocation7 + $0x88] sm:$0xff]
    %v414 = vld [vmem:[#allocation7 + $0x90] sm:$0xff]
    %v415 = vld [vmem:[#allocation7 + $0x98] sm:$0xff]
    %v416 = vld [vmem:[#allocation7 + $0xa0] sm:$0xff]
    %v417 = vld [vmem:[#allocation7 + $0xa8] sm:$0xff]
    %v418 = vld [vmem:[#allocation7 + $0xb0] sm:$0xff]
    %v419 = vld [vmem:[#allocation7 + $0xb8] sm:$0xff]
    %v420 = vld [vmem:[#allocation7 + $0xc0] sm:$0xff]
    %v421 = vld [vmem:[#allocation7 + $0xc8] sm:$0xff]
    %v422 = vld [vmem:[#allocation7 + $0xd0] sm:$0xff]
    %v423 = vld [vmem:[#allocation7 + $0xd8] sm:$0xff]
    %v424 = vld [vmem:[#allocation7 + $0xe0] sm:$0xff]
    %v425 = vld [vmem:[#allocation7 + $0xe8] sm:$0xff]
    %v426 = vld [vmem:[#allocation7 + $0xf0] sm:$0xff]
    %v427 = vld [vmem:[#allocation7 + $0xf8] sm:$0xff]
    %v428 = vld [vmem:[#allocation7 + $0x100] sm:$0xff]
    %v429 = vld [vmem:[#allocation7 + $0x108] sm:$0xff]
    %v430 = vld [vmem:[#allocation7 + $0x110] sm:$0xff]
    %v431 = vld [vmem:[#allocation7 + $0x118] sm:$0xff]
    %v432 = vld [vmem:[#allocation7 + $0x120] sm:$0xff]
    %v433 = vld [vmem:[#allocation7 + $0x128] sm:$0xff]
    %v434 = vld [vmem:[#allocation7 + $0x130] sm:$0xff]
    %v435 = vld [vmem:[#allocation7 + $0x138] sm:$0xff]
    %v436 = vld [vmem:[#allocation7 + $0x140] sm:$0xff]
    %v437 = vld [vmem:[#allocation7 + $0x148] sm:$0xff]
    %v438 = vld [vmem:[#allocation7 + $0x150] sm:$0xff]
    %v439 = vld [vmem:[#allocation7 + $0x158] sm:$0xff]
    %v440 = vld [vmem:[#allocation7 + $0x160] sm:$0xff]
    %v441 = vld [vmem:[#allocation7 + $0x168] sm:$0xff]
    %v442 = vld [vmem:[#allocation7 + $0x170] sm:$0xff]
    %v443 = vld [vmem:[#allocation7 + $0x178] sm:$0xff]
    %v444 = vld [vmem:[#allocation7 + $0x180] sm:$0xff]
    %v445 = vld [vmem:[#allocation7 + $0x188] sm:$0xff]
    %v446 = vld [vmem:[#allocation7 + $0x190] sm:$0xff]
    %v447 = vld [vmem:[#allocation7 + $0x198] sm:$0xff]
    %v448 = vld [vmem:[#allocation7 + $0x1a0] sm:$0xff]
    %v449 = vld [vmem:[#allocation7 + $0x1a8] sm:$0xff]
    %v450 = vld [vmem:[#allocation7 + $0x1b0] sm:$0xff]
    %v451 = vld [vmem:[#allocation7 + $0x1b8] sm:$0xff]
    %v452 = vld [vmem:[#allocation7 + $0x1c0] sm:$0xff]
    %v453 = vld [vmem:[#allocation7 + $0x1c8] sm:$0xff]
    %v454 = vld [vmem:[#allocation7 + $0x1d0] sm:$0xff]
    %v455 = vld [vmem:[#allocation7 + $0x1d8] sm:$0xff]
    %v456 = vld [vmem:[#allocation7 + $0x1e0] sm:$0xff]
    %v457 = vld [vmem:[#allocation7 + $0x1e8] sm:$0xff]
    %v458 = vld [vmem:[#allocation7 + $0x1f0] sm:$0xff]
    %v459 = vld [vmem:[#allocation7 + $0x1f8] sm:$0xff]
    %v460 = vld [vmem:[#allocation7 + $0x200] sm:$0xff]
    %v461 = vld [vmem:[#allocation7 + $0x208] sm:$0xff]
    %v462 = vld [vmem:[#allocation7 + $0x210] sm:$0xff]
    %v463 = vld [vmem:[#allocation7 + $0x218] sm:$0xff]
    %v464 = vld [vmem:[#allocation7 + $0x220] sm:$0xff]
    %v465 = vld [vmem:[#allocation7 + $0x228] sm:$0xff]
    %v466 = vld [vmem:[#allocation7 + $0x230] sm:$0xff]
    %v467 = vld [vmem:[#allocation7 + $0x238] sm:$0xff]
    %v468 = vld [vmem:[#allocation7 + $0x240] sm:$0xff]
    %v469 = vld [vmem:[#allocation7 + $0x248] sm:$0xff]
    %v470 = vld [vmem:[#allocation7 + $0x250] sm:$0xff]
    %v471 = vld [vmem:[#allocation7 + $0x258] sm:$0xff]
    %v472 = vld [vmem:[#allocation7 + $0x260] sm:$0xff]
    %v473 = vld [vmem:[#allocation7 + $0x268] sm:$0xff]
    %v474 = vld [vmem:[#allocation7 + $0x270] sm:$0xff]
    %v475 = vld [vmem:[#allocation7 + $0x278] sm:$0xff]
    %v476 = vld [vmem:[#allocation7 + $0x280] sm:$0xff]
    %v477 = vld [vmem:[#allocation7 + $0x288] sm:$0xff]
    %v478 = vld [vmem:[#allocation7 + $0x290] sm:$0xff]
    %v479 = vld [vmem:[#allocation7 + $0x298] sm:$0xff]
    %v480 = vld [vmem:[#allocation7 + $0x2a0] sm:$0xff]
    %v481 = vld [vmem:[#allocation7 + $0x2a8] sm:$0xff]
    %v482 = vld [vmem:[#allocation7 + $0x2b0] sm:$0xff]
    %v483 = vld [vmem:[#allocation7 + $0x2b8] sm:$0xff]
    %v484 = vld [vmem:[#allocation7 + $0x2c0] sm:$0xff]
    %v485 = vld [vmem:[#allocation7 + $0x2c8] sm:$0xff]
    %v486 = vld [vmem:[#allocation7 + $0x2d0] sm:$0xff]
    %v487 = vld [vmem:[#allocation7 + $0x2d8] sm:$0xff]
    %v488 = vld [vmem:[#allocation7 + $0x2e0] sm:$0xff]
    %v489 = vld [vmem:[#allocation7 + $0x2e8] sm:$0xff]
    %v490 = vld [vmem:[#allocation7 + $0x2f0] sm:$0xff]
    %v491 = vld [vmem:[#allocation7 + $0x2f8] sm:$0xff]
    %v492 = vld [vmem:[#allocation7 + $0x300] sm:$0xff]
    %v493 = vld [vmem:[#allocation7 + $0x308] sm:$0xff]
    %v494 = vld [vmem:[#allocation7 + $0x310] sm:$0xff]
    %v495 = vld [vmem:[#allocation7 + $0x318] sm:$0xff]
    %v496 = vld [vmem:[#allocation7 + $0x320] sm:$0xff]
    %v497 = vld [vmem:[#allocation7 + $0x328] sm:$0xff]
    %v498 = vld [vmem:[#allocation7 + $0x330] sm:$0xff]
    %v499 = vld [vmem:[#allocation7 + $0x338] sm:$0xff]
    %v500 = vld [vmem:[#allocation7 + $0x340] sm:$0xff]
    %v501 = vld [vmem:[#allocation7 + $0x348] sm:$0xff]
    %v502 = vld [vmem:[#allocation7 + $0x350] sm:$0xff]
    %v503 = vld [vmem:[#allocation7 + $0x358] sm:$0xff]
    %v504 = vld [vmem:[#allocation7 + $0x360] sm:$0xff]
    %v505 = vld [vmem:[#allocation7 + $0x368] sm:$0xff]
    %v506 = vld [vmem:[#allocation7 + $0x370] sm:$0xff]
    %v507 = vld [vmem:[#allocation7 + $0x378] sm:$0xff]
    %v508 = vld [vmem:[#allocation7 + $0x380] sm:$0xff]
    %v509 = vld [vmem:[#allocation7 + $0x388] sm:$0xff]
    %v510 = vld [vmem:[#allocation7 + $0x390] sm:$0xff]
    %v511 = vld [vmem:[#allocation7 + $0x398] sm:$0xff]
    %v512 = vld [vmem:[#allocation7 + $0x3a0] sm:$0xff]
    %v513 = vld [vmem:[#allocation7 + $0x3a8] sm:$0xff]
    %v514 = vld [vmem:[#allocation7 + $0x3b0] sm:$0xff]
    %v515 = vld [vmem:[#allocation7 + $0x3b8] sm:$0xff]
    %v516 = vld [vmem:[#allocation7 + $0x3c0] sm:$0xff]
    %v517 = vld [vmem:[#allocation7 + $0x3c8] sm:$0xff]
    %v518 = vld [vmem:[#allocation7 + $0x3d0] sm:$0xff]
    %v519 = vld [vmem:[#allocation7 + $0x3d8] sm:$0xff]
    %v520 = vld [vmem:[#allocation7 + $0x3e0] sm:$0xff]
    %v521 = vld [vmem:[#allocation7 + $0x3e8] sm:$0xff]
    %v522 = vld [vmem:[#allocation7 + $0x3f0] sm:$0xff]
    %v523 = vld [vmem:[#allocation7 + $0x3f8] sm:$0xff]
    %v524 = vld [vmem:[#allocation13 + $0x4] sm:$0xf]
    %v526 = vperm.slane %v524, 0
    %v527 = vperm.slane %v524, 1
    %v528 = vperm.slane %v524, 2
    %v529 = vperm.slane %v524, 3
    %v662 = vunpack.c.l.b16 %v396
    %v663 = vunpack.c.h.b16 %v396
    %v664 = vunpack.c.l.b16 %v397
    %v665 = vunpack.c.h.b16 %v397
    %v666 = vunpack.c.l.b16 %v398
    %v667 = vunpack.c.h.b16 %v398
    %v668 = vunpack.c.l.b16 %v399
    %v669 = vunpack.c.h.b16 %v399
    %v670 = vunpack.c.l.b16 %v400
    %v671 = vunpack.c.h.b16 %v400
    %v672 = vunpack.c.l.b16 %v401
    %v673 = vunpack.c.h.b16 %v401
    %v674 = vunpack.c.l.b16 %v402
    %v675 = vunpack.c.h.b16 %v402
    %v676 = vunpack.c.l.b16 %v403
    %v677 = vunpack.c.h.b16 %v403
    %v678 = vunpack.c.l.b16 %v404
    %v679 = vunpack.c.h.b16 %v404
    %v680 = vunpack.c.l.b16 %v405
    %v681 = vunpack.c.h.b16 %v405
    %v682 = vunpack.c.l.b16 %v406
    %v683 = vunpack.c.h.b16 %v406
    %v684 = vunpack.c.l.b16 %v407
    %v685 = vunpack.c.h.b16 %v407
    %v686 = vunpack.c.l.b16 %v408
    %v687 = vunpack.c.h.b16 %v408
    %v688 = vunpack.c.l.b16 %v409
    %v689 = vunpack.c.h.b16 %v409
    %v690 = vunpack.c.l.b16 %v410
    %v691 = vunpack.c.h.b16 %v410
    %v692 = vunpack.c.l.b16 %v411
    %v693 = vunpack.c.h.b16 %v411
    %v694 = vunpack.c.l.b16 %v412
    %v695 = vunpack.c.h.b16 %v412
    %v696 = vunpack.c.l.b16 %v413
    %v697 = vunpack.c.h.b16 %v413
    %v698 = vunpack.c.l.b16 %v414
    %v699 = vunpack.c.h.b16 %v414
    %v700 = vunpack.c.l.b16 %v415
    %v701 = vunpack.c.h.b16 %v415
    %v702 = vunpack.c.l.b16 %v416
    %v703 = vunpack.c.h.b16 %v416
    %v704 = vunpack.c.l.b16 %v417
    %v705 = vunpack.c.h.b16 %v417
    %v706 = vunpack.c.l.b16 %v418
    %v707 = vunpack.c.h.b16 %v418
    %v708 = vunpack.c.l.b16 %v419
    %v709 = vunpack.c.h.b16 %v419
    %v710 = vunpack.c.l.b16 %v420
    %v711 = vunpack.c.h.b16 %v420
    %v712 = vunpack.c.l.b16 %v421
    %v713 = vunpack.c.h.b16 %v421
    %v714 = vunpack.c.l.b16 %v422
    %v715 = vunpack.c.h.b16 %v422
    %v716 = vunpack.c.l.b16 %v423
    %v717 = vunpack.c.h.b16 %v423
    %v718 = vunpack.c.l.b16 %v424
    %v719 = vunpack.c.h.b16 %v424
    %v720 = vunpack.c.l.b16 %v425
    %v721 = vunpack.c.h.b16 %v425
    %v722 = vunpack.c.l.b16 %v426
    %v723 = vunpack.c.h.b16 %v426
    %v724 = vunpack.c.l.b16 %v427
    %v725 = vunpack.c.h.b16 %v427
    %v726 = vunpack.c.l.b16 %v428
    %v727 = vunpack.c.h.b16 %v428
    %v728 = vunpack.c.l.b16 %v429
    %v729 = vunpack.c.h.b16 %v429
    %v730 = vunpack.c.l.b16 %v430
    %v731 = vunpack.c.h.b16 %v430
    %v732 = vunpack.c.l.b16 %v431
    %v733 = vunpack.c.h.b16 %v431
    %v734 = vunpack.c.l.b16 %v432
    %v735 = vunpack.c.h.b16 %v432
    %v736 = vunpack.c.l.b16 %v433
    %v737 = vunpack.c.h.b16 %v433
    %v738 = vunpack.c.l.b16 %v434
    %v739 = vunpack.c.h.b16 %v434
    %v740 = vunpack.c.l.b16 %v435
    %v741 = vunpack.c.h.b16 %v435
    %v742 = vunpack.c.l.b16 %v436
    %v743 = vunpack.c.h.b16 %v436
    %v744 = vunpack.c.l.b16 %v437
    %v745 = vunpack.c.h.b16 %v437
    %v746 = vunpack.c.l.b16 %v438
    %v747 = vunpack.c.h.b16 %v438
    %v748 = vunpack.c.l.b16 %v439
    %v749 = vunpack.c.h.b16 %v439
    %v750 = vunpack.c.l.b16 %v440
    %v751 = vunpack.c.h.b16 %v440
    %v752 = vunpack.c.l.b16 %v441
    %v753 = vunpack.c.h.b16 %v441
    %v754 = vunpack.c.l.b16 %v442
    %v755 = vunpack.c.h.b16 %v442
    %v756 = vunpack.c.l.b16 %v443
    %v757 = vunpack.c.h.b16 %v443
    %v758 = vunpack.c.l.b16 %v444
    %v759 = vunpack.c.h.b16 %v444
    %v760 = vunpack.c.l.b16 %v445
    %v761 = vunpack.c.h.b16 %v445
    %v762 = vunpack.c.l.b16 %v446
    %v763 = vunpack.c.h.b16 %v446
    %v764 = vunpack.c.l.b16 %v447
    %v765 = vunpack.c.h.b16 %v447
    %v766 = vunpack.c.l.b16 %v448
    %v767 = vunpack.c.h.b16 %v448
    %v768 = vunpack.c.l.b16 %v449
    %v769 = vunpack.c.h.b16 %v449
    %v770 = vunpack.c.l.b16 %v450
    %v771 = vunpack.c.h.b16 %v450
    %v772 = vunpack.c.l.b16 %v451
    %v773 = vunpack.c.h.b16 %v451
    %v774 = vunpack.c.l.b16 %v452
    %v775 = vunpack.c.h.b16 %v452
    %v776 = vunpack.c.l.b16 %v453
    %v777 = vunpack.c.h.b16 %v453
    %v778 = vunpack.c.l.b16 %v454
    %v779 = vunpack.c.h.b16 %v454
    %v780 = vunpack.c.l.b16 %v455
    %v781 = vunpack.c.h.b16 %v455
    %v782 = vunpack.c.l.b16 %v456
    %v783 = vunpack.c.h.b16 %v456
    %v784 = vunpack.c.l.b16 %v457
    %v785 = vunpack.c.h.b16 %v457
    %v786 = vunpack.c.l.b16 %v458
    %v787 = vunpack.c.h.b16 %v458
    %v788 = vunpack.c.l.b16 %v459
    %v789 = vunpack.c.h.b16 %v459
    %v790 = vunpack.c.l.b16 %v460
    %v791 = vunpack.c.h.b16 %v460
    %v792 = vunpack.c.l.b16 %v461
    %v793 = vunpack.c.h.b16 %v461
    %v794 = vunpack.c.l.b16 %v462
    %v795 = vunpack.c.h.b16 %v462
    %v796 = vunpack.c.l.b16 %v463
    %v797 = vunpack.c.h.b16 %v463
    %v798 = vunpack.c.l.b16 %v464
    %v799 = vunpack.c.h.b16 %v464
    %v800 = vunpack.c.l.b16 %v465
    %v801 = vunpack.c.h.b16 %v465
    %v802 = vunpack.c.l.b16 %v466
    %v803 = vunpack.c.h.b16 %v466
    %v804 = vunpack.c.l.b16 %v467
    %v805 = vunpack.c.h.b16 %v467
    %v806 = vunpack.c.l.b16 %v468
    %v807 = vunpack.c.h.b16 %v468
    %v808 = vunpack.c.l.b16 %v469
    %v809 = vunpack.c.h.b16 %v469
    %v810 = vunpack.c.l.b16 %v470
    %v811 = vunpack.c.h.b16 %v470
    %v812 = vunpack.c.l.b16 %v471
    %v813 = vunpack.c.h.b16 %v471
    %v814 = vunpack.c.l.b16 %v472
    %v815 = vunpack.c.h.b16 %v472
    %v816 = vunpack.c.l.b16 %v473
    %v817 = vunpack.c.h.b16 %v473
    %v818 = vunpack.c.l.b16 %v474
    %v819 = vunpack.c.h.b16 %v474
    %v820 = vunpack.c.l.b16 %v475
    %v821 = vunpack.c.h.b16 %v475
    %v822 = vunpack.c.l.b16 %v476
    %v823 = vunpack.c.h.b16 %v476
    %v824 = vunpack.c.l.b16 %v477
    %v825 = vunpack.c.h.b16 %v477
    %v826 = vunpack.c.l.b16 %v478
    %v827 = vunpack.c.h.b16 %v478
    %v828 = vunpack.c.l.b16 %v479
    %v829 = vunpack.c.h.b16 %v479
    %v830 = vunpack.c.l.b16 %v480
    %v831 = vunpack.c.h.b16 %v480
    %v832 = vunpack.c.l.b16 %v481
    %v833 = vunpack.c.h.b16 %v481
    %v834 = vunpack.c.l.b16 %v482
    %v835 = vunpack.c.h.b16 %v482
    %v836 = vunpack.c.l.b16 %v483
    %v837 = vunpack.c.h.b16 %v483
    %v838 = vunpack.c.l.b16 %v484
    %v839 = vunpack.c.h.b16 %v484
    %v840 = vunpack.c.l.b16 %v485
    %v841 = vunpack.c.h.b16 %v485
    %v842 = vunpack.c.l.b16 %v486
    %v843 = vunpack.c.h.b16 %v486
    %v844 = vunpack.c.l.b16 %v487
    %v845 = vunpack.c.h.b16 %v487
    %v846 = vunpack.c.l.b16 %v488
    %v847 = vunpack.c.h.b16 %v488
    %v848 = vunpack.c.l.b16 %v489
    %v849 = vunpack.c.h.b16 %v489
    %v850 = vunpack.c.l.b16 %v490
    %v851 = vunpack.c.h.b16 %v490
    %v852 = vunpack.c.l.b16 %v491
    %v853 = vunpack.c.h.b16 %v491
    %v854 = vunpack.c.l.b16 %v492
    %v855 = vunpack.c.h.b16 %v492
    %v856 = vunpack.c.l.b16 %v493
    %v857 = vunpack.c.h.b16 %v493
    %v858 = vunpack.c.l.b16 %v494
    %v859 = vunpack.c.h.b16 %v494
    %v860 = vunpack.c.l.b16 %v495
    %v861 = vunpack.c.h.b16 %v495
    %v862 = vunpack.c.l.b16 %v496
    %v863 = vunpack.c.h.b16 %v496
    %v864 = vunpack.c.l.b16 %v497
    %v865 = vunpack.c.h.b16 %v497
    %v866 = vunpack.c.l.b16 %v498
    %v867 = vunpack.c.h.b16 %v498
    %v868 = vunpack.c.l.b16 %v499
    %v869 = vunpack.c.h.b16 %v499
    %v870 = vunpack.c.l.b16 %v500
    %v871 = vunpack.c.h.b16 %v500
    %v872 = vunpack.c.l.b16 %v501
    %v873 = vunpack.c.h.b16 %v501
    %v874 = vunpack.c.l.b16 %v502
    %v875 = vunpack.c.h.b16 %v502
    %v876 = vunpack.c.l.b16 %v503
    %v877 = vunpack.c.h.b16 %v503
    %v878 = vunpack.c.l.b16 %v504
    %v879 = vunpack.c.h.b16 %v504
    %v880 = vunpack.c.l.b16 %v505
    %v881 = vunpack.c.h.b16 %v505
    %v882 = vunpack.c.l.b16 %v506
    %v883 = vunpack.c.h.b16 %v506
    %v884 = vunpack.c.l.b16 %v507
    %v885 = vunpack.c.h.b16 %v507
    %v886 = vunpack.c.l.b16 %v508
    %v887 = vunpack.c.h.b16 %v508
    %v888 = vunpack.c.l.b16 %v509
    %v889 = vunpack.c.h.b16 %v509
    %v890 = vunpack.c.l.b16 %v510
    %v891 = vunpack.c.h.b16 %v510
    %v892 = vunpack.c.l.b16 %v511
    %v893 = vunpack.c.h.b16 %v511
    %v894 = vunpack.c.l.b16 %v512
    %v895 = vunpack.c.h.b16 %v512
    %v896 = vunpack.c.l.b16 %v513
    %v897 = vunpack.c.h.b16 %v513
    %v898 = vunpack.c.l.b16 %v514
    %v899 = vunpack.c.h.b16 %v514
    %v900 = vunpack.c.l.b16 %v515
    %v901 = vunpack.c.h.b16 %v515
    %v902 = vunpack.c.l.b16 %v516
    %v903 = vunpack.c.h.b16 %v516
    %v904 = vunpack.c.l.b16 %v517
    %v905 = vunpack.c.h.b16 %v517
    %v906 = vunpack.c.l.b16 %v518
    %v907 = vunpack.c.h.b16 %v518
    %v908 = vunpack.c.l.b16 %v519
    %v909 = vunpack.c.h.b16 %v519
    %v910 = vunpack.c.l.b16 %v520
    %v911 = vunpack.c.h.b16 %v520
    %v912 = vunpack.c.l.b16 %v521
    %v913 = vunpack.c.h.b16 %v521
    %v914 = vunpack.c.l.b16 %v522
    %v915 = vunpack.c.h.b16 %v522
    %v916 = vunpack.c.l.b16 %v523
    %v917 = vunpack.c.h.b16 %v523
    %v918 = vpack.c.b16 %v666, %v662
    %v919 = vpack.c.b16 %v667, %v663
    %v920 = vpack.c.b16 %v668, %v664
    %v921 = vpack.c.b16 %v669, %v665
    %v922 = vpack.c.b16 %v674, %v670
    %v923 = vpack.c.b16 %v675, %v671
    %v924 = vpack.c.b16 %v676, %v672
    %v925 = vpack.c.b16 %v677, %v673
    %v926 = vpack.c.b16 %v682, %v678
    %v927 = vpack.c.b16 %v683, %v679
    %v928 = vpack.c.b16 %v684, %v680
    %v929 = vpack.c.b16 %v685, %v681
    %v930 = vpack.c.b16 %v690, %v686
    %v931 = vpack.c.b16 %v691, %v687
    %v932 = vpack.c.b16 %v692, %v688
    %v933 = vpack.c.b16 %v693, %v689
    %v934 = vpack.c.b16 %v698, %v694
    %v935 = vpack.c.b16 %v699, %v695
    %v936 = vpack.c.b16 %v700, %v696
    %v937 = vpack.c.b16 %v701, %v697
    %v938 = vpack.c.b16 %v706, %v702
    %v939 = vpack.c.b16 %v707, %v703
    %v940 = vpack.c.b16 %v708, %v704
    %v941 = vpack.c.b16 %v709, %v705
    %v942 = vpack.c.b16 %v714, %v710
    %v943 = vpack.c.b16 %v715, %v711
    %v944 = vpack.c.b16 %v716, %v712
    %v945 = vpack.c.b16 %v717, %v713
    %v946 = vpack.c.b16 %v722, %v718
    %v947 = vpack.c.b16 %v723, %v719
    %v948 = vpack.c.b16 %v724, %v720
    %v949 = vpack.c.b16 %v725, %v721
    %v950 = vpack.c.b16 %v730, %v726
    %v951 = vpack.c.b16 %v731, %v727
    %v952 = vpack.c.b16 %v732, %v728
    %v953 = vpack.c.b16 %v733, %v729
    %v954 = vpack.c.b16 %v738, %v734
    %v955 = vpack.c.b16 %v739, %v735
    %v956 = vpack.c.b16 %v740, %v736
    %v957 = vpack.c.b16 %v741, %v737
    %v958 = vpack.c.b16 %v746, %v742
    %v959 = vpack.c.b16 %v747, %v743
    %v960 = vpack.c.b16 %v748, %v744
    %v961 = vpack.c.b16 %v749, %v745
    %v962 = vpack.c.b16 %v754, %v750
    %v963 = vpack.c.b16 %v755, %v751
    %v964 = vpack.c.b16 %v756, %v752
    %v965 = vpack.c.b16 %v757, %v753
    %v966 = vpack.c.b16 %v762, %v758
    %v967 = vpack.c.b16 %v763, %v759
    %v968 = vpack.c.b16 %v764, %v760
    %v969 = vpack.c.b16 %v765, %v761
    %v970 = vpack.c.b16 %v770, %v766
    %v971 = vpack.c.b16 %v771, %v767
    %v972 = vpack.c.b16 %v772, %v768
    %v973 = vpack.c.b16 %v773, %v769
    %v974 = vpack.c.b16 %v778, %v774
    %v975 = vpack.c.b16 %v779, %v775
    %v976 = vpack.c.b16 %v780, %v776
    %v977 = vpack.c.b16 %v781, %v777
    %v978 = vpack.c.b16 %v786, %v782
    %v979 = vpack.c.b16 %v787, %v783
    %v980 = vpack.c.b16 %v788, %v784
    %v981 = vpack.c.b16 %v789, %v785
    %v982 = vpack.c.b16 %v794, %v790
    %v983 = vpack.c.b16 %v795, %v791
    %v984 = vpack.c.b16 %v796, %v792
    %v985 = vpack.c.b16 %v797, %v793
    %v986 = vpack.c.b16 %v802, %v798
    %v987 = vpack.c.b16 %v803, %v799
    %v988 = vpack.c.b16 %v804, %v800
    %v989 = vpack.c.b16 %v805, %v801
    %v990 = vpack.c.b16 %v810, %v806
    %v991 = vpack.c.b16 %v811, %v807
    %v992 = vpack.c.b16 %v812, %v808
    %v993 = vpack.c.b16 %v813, %v809
    %v994 = vpack.c.b16 %v818, %v814
    %v995 = vpack.c.b16 %v819, %v815
    %v996 = vpack.c.b16 %v820, %v816
    %v997 = vpack.c.b16 %v821, %v817
    %v998 = vpack.c.b16 %v826, %v822
    %v999 = vpack.c.b16 %v827, %v823
    %v1000 = vpack.c.b16 %v828, %v824
    %v1001 = vpack.c.b16 %v829, %v825
    %v1002 = vpack.c.b16 %v834, %v830
    %v1003 = vpack.c.b16 %v835, %v831
    %v1004 = vpack.c.b16 %v836, %v832
    %v1005 = vpack.c.b16 %v837, %v833
    %v1006 = vpack.c.b16 %v842, %v838
    %v1007 = vpack.c.b16 %v843, %v839
    %v1008 = vpack.c.b16 %v844, %v840
    %v1009 = vpack.c.b16 %v845, %v841
    %v1010 = vpack.c.b16 %v850, %v846
    %v1011 = vpack.c.b16 %v851, %v847
    %v1012 = vpack.c.b16 %v852, %v848
    %v1013 = vpack.c.b16 %v853, %v849
    %v1014 = vpack.c.b16 %v858, %v854
    %v1015 = vpack.c.b16 %v859, %v855
    %v1016 = vpack.c.b16 %v860, %v856
    %v1017 = vpack.c.b16 %v861, %v857
    %v1018 = vpack.c.b16 %v866, %v862
    %v1019 = vpack.c.b16 %v867, %v863
    %v1020 = vpack.c.b16 %v868, %v864
    %v1021 = vpack.c.b16 %v869, %v865
    %v1022 = vpack.c.b16 %v874, %v870
    %v1023 = vpack.c.b16 %v875, %v871
    %v1024 = vpack.c.b16 %v876, %v872
    %v1025 = vpack.c.b16 %v877, %v873
    %v1026 = vpack.c.b16 %v882, %v878
    %v1027 = vpack.c.b16 %v883, %v879
    %v1028 = vpack.c.b16 %v884, %v880
    %v1029 = vpack.c.b16 %v885, %v881
    %v1030 = vpack.c.b16 %v890, %v886
    %v1031 = vpack.c.b16 %v891, %v887
    %v1032 = vpack.c.b16 %v892, %v888
    %v1033 = vpack.c.b16 %v893, %v889
    %v1034 = vpack.c.b16 %v898, %v894
    %v1035 = vpack.c.b16 %v899, %v895
    %v1036 = vpack.c.b16 %v900, %v896
    %v1037 = vpack.c.b16 %v901, %v897
    %v1038 = vpack.c.b16 %v906, %v902
    %v1039 = vpack.c.b16 %v907, %v903
    %v1040 = vpack.c.b16 %v908, %v904
    %v1041 = vpack.c.b16 %v909, %v905
    %v1042 = vpack.c.b16 %v914, %v910
    %v1043 = vpack.c.b16 %v915, %v911
    %v1044 = vpack.c.b16 %v916, %v912
    %v1045 = vpack.c.b16 %v917, %v913
    %1174 = vmatpush.bf16.msra.mxu0 %v946
    %1175 = vmatpush.bf16.msra.mxu0 %v942
    %1176 = vmatpush.bf16.msra.mxu0 %v938
    %1177 = vmatpush.bf16.msra.mxu0 %v934
    %1178 = vmatpush.bf16.msra.mxu0 %v930
    %1179 = vmatpush.bf16.msra.mxu0 %v926
    %1180 = vmatpush.bf16.msra.mxu0 %v922
    %1181 = vmatpush.bf16.msra.mxu0 %v918
    %1182 = vmatmul.bf16.gmra.mxu0 %v392
    %v1183 = vpop.f32.mrf.mxu0
    %v1184 = vadd.f32 %v526, %v1183
    %v1185 = vpop.f32.mrf.mxu0
    %1186 = vdwg.mxu0
    %1187 = vmatpush.bf16.msra.mxu0 %v978
    %1188 = vmatpush.bf16.msra.mxu0 %v974
    %1189 = vmatpush.bf16.msra.mxu0 %v970
    %1190 = vmatpush.bf16.msra.mxu0 %v966
    %1191 = vmatpush.bf16.msra.mxu0 %v962
    %1192 = vmatpush.bf16.msra.mxu0 %v958
    %1193 = vmatpush.bf16.msra.mxu0 %v954
    %1194 = vmatpush.bf16.msra.mxu0 %v950
    %1195 = vmatmul.bf16.gmra.mxu0 %v393
    %v1196 = vpop.f32.mrf.mxu0
    %v1197 = vadd.f32 %v1184, %v1196
    %v1198 = vpop.f32.mrf.mxu0
    %1199 = vdwg.mxu0
    %1200 = vmatpush.bf16.msra.mxu0 %v1010
    %1201 = vmatpush.bf16.msra.mxu0 %v1006
    %1202 = vmatpush.bf16.msra.mxu0 %v1002
    %1203 = vmatpush.bf16.msra.mxu0 %v998
    %1204 = vmatpush.bf16.msra.mxu0 %v994
    %1205 = vmatpush.bf16.msra.mxu0 %v990
    %1206 = vmatpush.bf16.msra.mxu0 %v986
    %1207 = vmatpush.bf16.msra.mxu0 %v982
    %1208 = vmatmul.bf16.gmra.mxu0 %v394
    %v1209 = vpop.f32.mrf.mxu0
    %v1210 = vadd.f32 %v1197, %v1209
    %v1211 = vpop.f32.mrf.mxu0
    %1212 = vdwg.mxu0
    %1213 = vmatpush.bf16.msra.mxu0 %v1042
    %1214 = vmatpush.bf16.msra.mxu0 %v1038
    %1215 = vmatpush.bf16.msra.mxu0 %v1034
    %1216 = vmatpush.bf16.msra.mxu0 %v1030
    %1217 = vmatpush.bf16.msra.mxu0 %v1026
    %1218 = vmatpush.bf16.msra.mxu0 %v1022
    %1219 = vmatpush.bf16.msra.mxu0 %v1018
    %1220 = vmatpush.bf16.msra.mxu0 %v1014
    %1221 = vmatmul.bf16.gmra.mxu0 %v395
    %v1222 = vpop.f32.mrf.mxu0
    %v1223 = vadd.f32 %v1210, %v1222
    %v1224 = vpop.f32.mrf.mxu0
    %1225 = vdwg.mxu0
    %1226 = vmatpush.bf16.msra.mxu0 %v947
    %1227 = vmatpush.bf16.msra.mxu0 %v943
    %1228 = vmatpush.bf16.msra.mxu0 %v939
    %1229 = vmatpush.bf16.msra.mxu0 %v935
    %1230 = vmatpush.bf16.msra.mxu0 %v931
    %1231 = vmatpush.bf16.msra.mxu0 %v927
    %1232 = vmatpush.bf16.msra.mxu0 %v923
    %1233 = vmatpush.bf16.msra.mxu0 %v919
    %1234 = vmatmul.bf16.gmra.mxu0 %v392
    %v1235 = vpop.f32.mrf.mxu0
    %v1236 = vadd.f32 %v527, %v1235
    %v1237 = vpop.f32.mrf.mxu0
    %1238 = vdwg.mxu0
    %1239 = vmatpush.bf16.msra.mxu0 %v979
    %1240 = vmatpush.bf16.msra.mxu0 %v975
    %1241 = vmatpush.bf16.msra.mxu0 %v971
    %1242 = vmatpush.bf16.msra.mxu0 %v967
    %1243 = vmatpush.bf16.msra.mxu0 %v963
    %1244 = vmatpush.bf16.msra.mxu0 %v959
    %1245 = vmatpush.bf16.msra.mxu0 %v955
    %1246 = vmatpush.bf16.msra.mxu0 %v951
    %1247 = vmatmul.bf16.gmra.mxu0 %v393
    %v1248 = vpop.f32.mrf.mxu0
    %v1249 = vadd.f32 %v1236, %v1248
    %v1250 = vpop.f32.mrf.mxu0
    %1251 = vdwg.mxu0
    %1252 = vmatpush.bf16.msra.mxu0 %v1011
    %1253 = vmatpush.bf16.msra.mxu0 %v1007
    %1254 = vmatpush.bf16.msra.mxu0 %v1003
    %1255 = vmatpush.bf16.msra.mxu0 %v999
    %1256 = vmatpush.bf16.msra.mxu0 %v995
    %1257 = vmatpush.bf16.msra.mxu0 %v991
    %1258 = vmatpush.bf16.msra.mxu0 %v987
    %1259 = vmatpush.bf16.msra.mxu0 %v983
    %1260 = vmatmul.bf16.gmra.mxu0 %v394
    %v1261 = vpop.f32.mrf.mxu0
    %v1262 = vadd.f32 %v1249, %v1261
    %v1263 = vpop.f32.mrf.mxu0
    %1264 = vdwg.mxu0
    %1265 = vmatpush.bf16.msra.mxu0 %v1043
    %1266 = vmatpush.bf16.msra.mxu0 %v1039
    %1267 = vmatpush.bf16.msra.mxu0 %v1035
    %1268 = vmatpush.bf16.msra.mxu0 %v1031
    %1269 = vmatpush.bf16.msra.mxu0 %v1027
    %1270 = vmatpush.bf16.msra.mxu0 %v1023
    %1271 = vmatpush.bf16.msra.mxu0 %v1019
    %1272 = vmatpush.bf16.msra.mxu0 %v1015
    %1273 = vmatmul.bf16.gmra.mxu0 %v395
    %v1274 = vpop.f32.mrf.mxu0
    %v1275 = vadd.f32 %v1262, %v1274
    %v1276 = vpop.f32.mrf.mxu0
    %1277 = vdwg.mxu0
    %1278 = vmatpush.bf16.msra.mxu0 %v948
    %1279 = vmatpush.bf16.msra.mxu0 %v944
    %1280 = vmatpush.bf16.msra.mxu0 %v940
    %1281 = vmatpush.bf16.msra.mxu0 %v936
    %1282 = vmatpush.bf16.msra.mxu0 %v932
    %1283 = vmatpush.bf16.msra.mxu0 %v928
    %1284 = vmatpush.bf16.msra.mxu0 %v924
    %1285 = vmatpush.bf16.msra.mxu0 %v920
    %1286 = vmatmul.bf16.gmra.mxu0 %v392
    %v1287 = vpop.f32.mrf.mxu0
    %v1288 = vadd.f32 %v528, %v1287
    %v1289 = vpop.f32.mrf.mxu0
    %1290 = vdwg.mxu0
    %1291 = vmatpush.bf16.msra.mxu0 %v980
    %1292 = vmatpush.bf16.msra.mxu0 %v976
    %1293 = vmatpush.bf16.msra.mxu0 %v972
    %1294 = vmatpush.bf16.msra.mxu0 %v968
    %1295 = vmatpush.bf16.msra.mxu0 %v964
    %1296 = vmatpush.bf16.msra.mxu0 %v960
    %1297 = vmatpush.bf16.msra.mxu0 %v956
    %1298 = vmatpush.bf16.msra.mxu0 %v952
    %1299 = vmatmul.bf16.gmra.mxu0 %v393
    %v1300 = vpop.f32.mrf.mxu0
    %v1301 = vadd.f32 %v1288, %v1300
    %v1302 = vpop.f32.mrf.mxu0
    %1303 = vdwg.mxu0
    %1304 = vmatpush.bf16.msra.mxu0 %v1012
    %1305 = vmatpush.bf16.msra.mxu0 %v1008
    %1306 = vmatpush.bf16.msra.mxu0 %v1004
    %1307 = vmatpush.bf16.msra.mxu0 %v1000
    %1308 = vmatpush.bf16.msra.mxu0 %v996
    %1309 = vmatpush.bf16.msra.mxu0 %v992
    %1310 = vmatpush.bf16.msra.mxu0 %v988
    %1311 = vmatpush.bf16.msra.mxu0 %v984
    %1312 = vmatmul.bf16.gmra.mxu0 %v394
    %v1313 = vpop.f32.mrf.mxu0
    %v1314 = vadd.f32 %v1301, %v1313
    %v1315 = vpop.f32.mrf.mxu0
    %1316 = vdwg.mxu0
    %1317 = vmatpush.bf16.msra.mxu0 %v1044
    %1318 = vmatpush.bf16.msra.mxu0 %v1040
    %1319 = vmatpush.bf16.msra.mxu0 %v1036
    %1320 = vmatpush.bf16.msra.mxu0 %v1032
    %1321 = vmatpush.bf16.msra.mxu0 %v1028
    %1322 = vmatpush.bf16.msra.mxu0 %v1024
    %1323 = vmatpush.bf16.msra.mxu0 %v1020
    %1324 = vmatpush.bf16.msra.mxu0 %v1016
    %1325 = vmatmul.bf16.gmra.mxu0 %v395
    %v1326 = vpop.f32.mrf.mxu0
    %v1327 = vadd.f32 %v1314, %v1326
    %v1328 = vpop.f32.mrf.mxu0
    %1329 = vdwg.mxu0
    %1330 = vmatpush.bf16.msra.mxu0 %v949
    %1331 = vmatpush.bf16.msra.mxu0 %v945
    %1332 = vmatpush.bf16.msra.mxu0 %v941
    %1333 = vmatpush.bf16.msra.mxu0 %v937
    %1334 = vmatpush.bf16.msra.mxu0 %v933
    %1335 = vmatpush.bf16.msra.mxu0 %v929
    %1336 = vmatpush.bf16.msra.mxu0 %v925
    %1337 = vmatpush.bf16.msra.mxu0 %v921
    %1338 = vmatmul.bf16.gmra.mxu0 %v392
    %v1339 = vpop.f32.mrf.mxu0
    %v1340 = vadd.f32 %v529, %v1339
    %v1341 = vpop.f32.mrf.mxu0
    %1342 = vdwg.mxu0
    %1343 = vmatpush.bf16.msra.mxu0 %v981
    %1344 = vmatpush.bf16.msra.mxu0 %v977
    %1345 = vmatpush.bf16.msra.mxu0 %v973
    %1346 = vmatpush.bf16.msra.mxu0 %v969
    %1347 = vmatpush.bf16.msra.mxu0 %v965
    %1348 = vmatpush.bf16.msra.mxu0 %v961
    %1349 = vmatpush.bf16.msra.mxu0 %v957
    %1350 = vmatpush.bf16.msra.mxu0 %v953
    %1351 = vmatmul.bf16.gmra.mxu0 %v393
    %v1352 = vpop.f32.mrf.mxu0
    %v1353 = vadd.f32 %v1340, %v1352
    %v1354 = vpop.f32.mrf.mxu0
    %1355 = vdwg.mxu0
    %1356 = vmatpush.bf16.msra.mxu0 %v1013
    %1357 = vmatpush.bf16.msra.mxu0 %v1009
    %1358 = vmatpush.bf16.msra.mxu0 %v1005
    %1359 = vmatpush.bf16.msra.mxu0 %v1001
    %1360 = vmatpush.bf16.msra.mxu0 %v997
    %1361 = vmatpush.bf16.msra.mxu0 %v993
    %1362 = vmatpush.bf16.msra.mxu0 %v989
    %1363 = vmatpush.bf16.msra.mxu0 %v985
    %1364 = vmatmul.bf16.gmra.mxu0 %v394
    %v1365 = vpop.f32.mrf.mxu0
    %v1366 = vadd.f32 %v1353, %v1365
    %v1367 = vpop.f32.mrf.mxu0
    %1368 = vdwg.mxu0
    %1369 = vmatpush.bf16.msra.mxu0 %v1045
    %1370 = vmatpush.bf16.msra.mxu0 %v1041
    %1371 = vmatpush.bf16.msra.mxu0 %v1037
    %1372 = vmatpush.bf16.msra.mxu0 %v1033
    %1373 = vmatpush.bf16.msra.mxu0 %v1029
    %1374 = vmatpush.bf16.msra.mxu0 %v1025
    %1375 = vmatpush.bf16.msra.mxu0 %v1021
    %1376 = vmatpush.bf16.msra.mxu0 %v1017
    %1377 = vmatmul.bf16.gmra.mxu0 %v395
    %v1378 = vpop.f32.mrf.mxu0
    %v1379 = vadd.f32 %v1366, %v1378
    %v1380 = vpop.f32.mrf.mxu0
    %1381 = vdwg.mxu0
    %v1382 = vmax.f32 %v1223, 0.0
    %v1383 = vmax.f32 %v1275, 0.0
    %v1384 = vmax.f32 %v1327, 0.0
    %v1385 = vmax.f32 %v1379, 0.0
    %v1386 = vpack.c.bf16 %v1382, %v1382
    %v1387 = vpack.c.bf16 %v1383, %v1383
    %v1388 = vpack.c.bf16 %v1384, %v1384
    %v1389 = vpack.c.bf16 %v1385, %v1385
    %v1390 = vld [vmem:[#allocation8] sm:$0xff]
    %v1391 = vld [vmem:[#allocation8 + $0x8] sm:$0xff]
    %v1392 = vld [vmem:[#allocation8 + $0x10] sm:$0xff]
    %v1393 = vld [vmem:[#allocation8 + $0x18] sm:$0xff]
    %v1394 = vld [vmem:[#allocation8 + $0x20] sm:$0xff]
    %v1395 = vld [vmem:[#allocation8 + $0x28] sm:$0xff]
    %v1396 = vld [vmem:[#allocation8 + $0x30] sm:$0xff]
    %v1397 = vld [vmem:[#allocation8 + $0x38] sm:$0xff]
    %v1398 = vld [vmem:[#allocation8 + $0x40] sm:$0xff]
    %v1399 = vld [vmem:[#allocation8 + $0x48] sm:$0xff]
    %v1400 = vld [vmem:[#allocation8 + $0x50] sm:$0xff]
    %v1401 = vld [vmem:[#allocation8 + $0x58] sm:$0xff]
    %v1402 = vld [vmem:[#allocation8 + $0x60] sm:$0xff]
    %v1403 = vld [vmem:[#allocation8 + $0x68] sm:$0xff]
    %v1404 = vld [vmem:[#allocation8 + $0x70] sm:$0xff]
    %v1405 = vld [vmem:[#allocation8 + $0x78] sm:$0xff]
    %v1406 = vld [vmem:[#allocation8 + $0x80] sm:$0xff]
    %v1407 = vld [vmem:[#allocation8 + $0x88] sm:$0xff]
    %v1408 = vld [vmem:[#allocation8 + $0x90] sm:$0xff]
    %v1409 = vld [vmem:[#allocation8 + $0x98] sm:$0xff]
    %v1410 = vld [vmem:[#allocation8 + $0xa0] sm:$0xff]
    %v1411 = vld [vmem:[#allocation8 + $0xa8] sm:$0xff]
    %v1412 = vld [vmem:[#allocation8 + $0xb0] sm:$0xff]
    %v1413 = vld [vmem:[#allocation8 + $0xb8] sm:$0xff]
    %v1414 = vld [vmem:[#allocation8 + $0xc0] sm:$0xff]
    %v1415 = vld [vmem:[#allocation8 + $0xc8] sm:$0xff]
    %v1416 = vld [vmem:[#allocation8 + $0xd0] sm:$0xff]
    %v1417 = vld [vmem:[#allocation8 + $0xd8] sm:$0xff]
    %v1418 = vld [vmem:[#allocation8 + $0xe0] sm:$0xff]
    %v1419 = vld [vmem:[#allocation8 + $0xe8] sm:$0xff]
    %v1420 = vld [vmem:[#allocation8 + $0xf0] sm:$0xff]
    %v1421 = vld [vmem:[#allocation8 + $0xf8] sm:$0xff]
    %v1422 = vld [vmem:[#allocation8 + $0x100] sm:$0xff]
    %v1423 = vld [vmem:[#allocation8 + $0x108] sm:$0xff]
    %v1424 = vld [vmem:[#allocation8 + $0x110] sm:$0xff]
    %v1425 = vld [vmem:[#allocation8 + $0x118] sm:$0xff]
    %v1426 = vld [vmem:[#allocation8 + $0x120] sm:$0xff]
    %v1427 = vld [vmem:[#allocation8 + $0x128] sm:$0xff]
    %v1428 = vld [vmem:[#allocation8 + $0x130] sm:$0xff]
    %v1429 = vld [vmem:[#allocation8 + $0x138] sm:$0xff]
    %v1430 = vld [vmem:[#allocation8 + $0x140] sm:$0xff]
    %v1431 = vld [vmem:[#allocation8 + $0x148] sm:$0xff]
    %v1432 = vld [vmem:[#allocation8 + $0x150] sm:$0xff]
    %v1433 = vld [vmem:[#allocation8 + $0x158] sm:$0xff]
    %v1434 = vld [vmem:[#allocation8 + $0x160] sm:$0xff]
    %v1435 = vld [vmem:[#allocation8 + $0x168] sm:$0xff]
    %v1436 = vld [vmem:[#allocation8 + $0x170] sm:$0xff]
    %v1437 = vld [vmem:[#allocation8 + $0x178] sm:$0xff]
    %v1438 = vld [vmem:[#allocation8 + $0x180] sm:$0xff]
    %v1439 = vld [vmem:[#allocation8 + $0x188] sm:$0xff]
    %v1440 = vld [vmem:[#allocation8 + $0x190] sm:$0xff]
    %v1441 = vld [vmem:[#allocation8 + $0x198] sm:$0xff]
    %v1442 = vld [vmem:[#allocation8 + $0x1a0] sm:$0xff]
    %v1443 = vld [vmem:[#allocation8 + $0x1a8] sm:$0xff]
    %v1444 = vld [vmem:[#allocation8 + $0x1b0] sm:$0xff]
    %v1445 = vld [vmem:[#allocation8 + $0x1b8] sm:$0xff]
    %v1446 = vld [vmem:[#allocation8 + $0x1c0] sm:$0xff]
    %v1447 = vld [vmem:[#allocation8 + $0x1c8] sm:$0xff]
    %v1448 = vld [vmem:[#allocation8 + $0x1d0] sm:$0xff]
    %v1449 = vld [vmem:[#allocation8 + $0x1d8] sm:$0xff]
    %v1450 = vld [vmem:[#allocation8 + $0x1e0] sm:$0xff]
    %v1451 = vld [vmem:[#allocation8 + $0x1e8] sm:$0xff]
    %v1452 = vld [vmem:[#allocation8 + $0x1f0] sm:$0xff]
    %v1453 = vld [vmem:[#allocation8 + $0x1f8] sm:$0xff]
    %v1454 = vld [vmem:[#allocation13 + $0x8] sm:$0x3]
    %v1456 = vperm.slane %v1454, 0
    %v1457 = vperm.slane %v1454, 1
    %v1524 = vunpack.c.l.b16 %v1390
    %v1525 = vunpack.c.h.b16 %v1390
    %v1526 = vunpack.c.l.b16 %v1391
    %v1527 = vunpack.c.h.b16 %v1391
    %v1528 = vunpack.c.l.b16 %v1392
    %v1529 = vunpack.c.h.b16 %v1392
    %v1530 = vunpack.c.l.b16 %v1393
    %v1531 = vunpack.c.h.b16 %v1393
    %v1532 = vunpack.c.l.b16 %v1394
    %v1533 = vunpack.c.h.b16 %v1394
    %v1534 = vunpack.c.l.b16 %v1395
    %v1535 = vunpack.c.h.b16 %v1395
    %v1536 = vunpack.c.l.b16 %v1396
    %v1537 = vunpack.c.h.b16 %v1396
    %v1538 = vunpack.c.l.b16 %v1397
    %v1539 = vunpack.c.h.b16 %v1397
    %v1540 = vunpack.c.l.b16 %v1398
    %v1541 = vunpack.c.h.b16 %v1398
    %v1542 = vunpack.c.l.b16 %v1399
    %v1543 = vunpack.c.h.b16 %v1399
    %v1544 = vunpack.c.l.b16 %v1400
    %v1545 = vunpack.c.h.b16 %v1400
    %v1546 = vunpack.c.l.b16 %v1401
    %v1547 = vunpack.c.h.b16 %v1401
    %v1548 = vunpack.c.l.b16 %v1402
    %v1549 = vunpack.c.h.b16 %v1402
    %v1550 = vunpack.c.l.b16 %v1403
    %v1551 = vunpack.c.h.b16 %v1403
    %v1552 = vunpack.c.l.b16 %v1404
    %v1553 = vunpack.c.h.b16 %v1404
    %v1554 = vunpack.c.l.b16 %v1405
    %v1555 = vunpack.c.h.b16 %v1405
    %v1556 = vunpack.c.l.b16 %v1406
    %v1557 = vunpack.c.h.b16 %v1406
    %v1558 = vunpack.c.l.b16 %v1407
    %v1559 = vunpack.c.h.b16 %v1407
    %v1560 = vunpack.c.l.b16 %v1408
    %v1561 = vunpack.c.h.b16 %v1408
    %v1562 = vunpack.c.l.b16 %v1409
    %v1563 = vunpack.c.h.b16 %v1409
    %v1564 = vunpack.c.l.b16 %v1410
    %v1565 = vunpack.c.h.b16 %v1410
    %v1566 = vunpack.c.l.b16 %v1411
    %v1567 = vunpack.c.h.b16 %v1411
    %v1568 = vunpack.c.l.b16 %v1412
    %v1569 = vunpack.c.h.b16 %v1412
    %v1570 = vunpack.c.l.b16 %v1413
    %v1571 = vunpack.c.h.b16 %v1413
    %v1572 = vunpack.c.l.b16 %v1414
    %v1573 = vunpack.c.h.b16 %v1414
    %v1574 = vunpack.c.l.b16 %v1415
    %v1575 = vunpack.c.h.b16 %v1415
    %v1576 = vunpack.c.l.b16 %v1416
    %v1577 = vunpack.c.h.b16 %v1416
    %v1578 = vunpack.c.l.b16 %v1417
    %v1579 = vunpack.c.h.b16 %v1417
    %v1580 = vunpack.c.l.b16 %v1418
    %v1581 = vunpack.c.h.b16 %v1418
    %v1582 = vunpack.c.l.b16 %v1419
    %v1583 = vunpack.c.h.b16 %v1419
    %v1584 = vunpack.c.l.b16 %v1420
    %v1585 = vunpack.c.h.b16 %v1420
    %v1586 = vunpack.c.l.b16 %v1421
    %v1587 = vunpack.c.h.b16 %v1421
    %v1588 = vunpack.c.l.b16 %v1422
    %v1589 = vunpack.c.h.b16 %v1422
    %v1590 = vunpack.c.l.b16 %v1423
    %v1591 = vunpack.c.h.b16 %v1423
    %v1592 = vunpack.c.l.b16 %v1424
    %v1593 = vunpack.c.h.b16 %v1424
    %v1594 = vunpack.c.l.b16 %v1425
    %v1595 = vunpack.c.h.b16 %v1425
    %v1596 = vunpack.c.l.b16 %v1426
    %v1597 = vunpack.c.h.b16 %v1426
    %v1598 = vunpack.c.l.b16 %v1427
    %v1599 = vunpack.c.h.b16 %v1427
    %v1600 = vunpack.c.l.b16 %v1428
    %v1601 = vunpack.c.h.b16 %v1428
    %v1602 = vunpack.c.l.b16 %v1429
    %v1603 = vunpack.c.h.b16 %v1429
    %v1604 = vunpack.c.l.b16 %v1430
    %v1605 = vunpack.c.h.b16 %v1430
    %v1606 = vunpack.c.l.b16 %v1431
    %v1607 = vunpack.c.h.b16 %v1431
    %v1608 = vunpack.c.l.b16 %v1432
    %v1609 = vunpack.c.h.b16 %v1432
    %v1610 = vunpack.c.l.b16 %v1433
    %v1611 = vunpack.c.h.b16 %v1433
    %v1612 = vunpack.c.l.b16 %v1434
    %v1613 = vunpack.c.h.b16 %v1434
    %v1614 = vunpack.c.l.b16 %v1435
    %v1615 = vunpack.c.h.b16 %v1435
    %v1616 = vunpack.c.l.b16 %v1436
    %v1617 = vunpack.c.h.b16 %v1436
    %v1618 = vunpack.c.l.b16 %v1437
    %v1619 = vunpack.c.h.b16 %v1437
    %v1620 = vunpack.c.l.b16 %v1438
    %v1621 = vunpack.c.h.b16 %v1438
    %v1622 = vunpack.c.l.b16 %v1439
    %v1623 = vunpack.c.h.b16 %v1439
    %v1624 = vunpack.c.l.b16 %v1440
    %v1625 = vunpack.c.h.b16 %v1440
    %v1626 = vunpack.c.l.b16 %v1441
    %v1627 = vunpack.c.h.b16 %v1441
    %v1628 = vunpack.c.l.b16 %v1442
    %v1629 = vunpack.c.h.b16 %v1442
    %v1630 = vunpack.c.l.b16 %v1443
    %v1631 = vunpack.c.h.b16 %v1443
    %v1632 = vunpack.c.l.b16 %v1444
    %v1633 = vunpack.c.h.b16 %v1444
    %v1634 = vunpack.c.l.b16 %v1445
    %v1635 = vunpack.c.h.b16 %v1445
    %v1636 = vunpack.c.l.b16 %v1446
    %v1637 = vunpack.c.h.b16 %v1446
    %v1638 = vunpack.c.l.b16 %v1447
    %v1639 = vunpack.c.h.b16 %v1447
    %v1640 = vunpack.c.l.b16 %v1448
    %v1641 = vunpack.c.h.b16 %v1448
    %v1642 = vunpack.c.l.b16 %v1449
    %v1643 = vunpack.c.h.b16 %v1449
    %v1644 = vunpack.c.l.b16 %v1450
    %v1645 = vunpack.c.h.b16 %v1450
    %v1646 = vunpack.c.l.b16 %v1451
    %v1647 = vunpack.c.h.b16 %v1451
    %v1648 = vunpack.c.l.b16 %v1452
    %v1649 = vunpack.c.h.b16 %v1452
    %v1650 = vunpack.c.l.b16 %v1453
    %v1651 = vunpack.c.h.b16 %v1453
    %v1652 = vpack.c.b16 %v1526, %v1524
    %v1653 = vpack.c.b16 %v1527, %v1525
    %v1654 = vpack.c.b16 %v1530, %v1528
    %v1655 = vpack.c.b16 %v1531, %v1529
    %v1656 = vpack.c.b16 %v1534, %v1532
    %v1657 = vpack.c.b16 %v1535, %v1533
    %v1658 = vpack.c.b16 %v1538, %v1536
    %v1659 = vpack.c.b16 %v1539, %v1537
    %v1660 = vpack.c.b16 %v1542, %v1540
    %v1661 = vpack.c.b16 %v1543, %v1541
    %v1662 = vpack.c.b16 %v1546, %v1544
    %v1663 = vpack.c.b16 %v1547, %v1545
    %v1664 = vpack.c.b16 %v1550, %v1548
    %v1665 = vpack.c.b16 %v1551, %v1549
    %v1666 = vpack.c.b16 %v1554, %v1552
    %v1667 = vpack.c.b16 %v1555, %v1553
    %v1668 = vpack.c.b16 %v1558, %v1556
    %v1669 = vpack.c.b16 %v1559, %v1557
    %v1670 = vpack.c.b16 %v1562, %v1560
    %v1671 = vpack.c.b16 %v1563, %v1561
    %v1672 = vpack.c.b16 %v1566, %v1564
    %v1673 = vpack.c.b16 %v1567, %v1565
    %v1674 = vpack.c.b16 %v1570, %v1568
    %v1675 = vpack.c.b16 %v1571, %v1569
    %v1676 = vpack.c.b16 %v1574, %v1572
    %v1677 = vpack.c.b16 %v1575, %v1573
    %v1678 = vpack.c.b16 %v1578, %v1576
    %v1679 = vpack.c.b16 %v1579, %v1577
    %v1680 = vpack.c.b16 %v1582, %v1580
    %v1681 = vpack.c.b16 %v1583, %v1581
    %v1682 = vpack.c.b16 %v1586, %v1584
    %v1683 = vpack.c.b16 %v1587, %v1585
    %v1684 = vpack.c.b16 %v1590, %v1588
    %v1685 = vpack.c.b16 %v1591, %v1589
    %v1686 = vpack.c.b16 %v1594, %v1592
    %v1687 = vpack.c.b16 %v1595, %v1593
    %v1688 = vpack.c.b16 %v1598, %v1596
    %v1689 = vpack.c.b16 %v1599, %v1597
    %v1690 = vpack.c.b16 %v1602, %v1600
    %v1691 = vpack.c.b16 %v1603, %v1601
    %v1692 = vpack.c.b16 %v1606, %v1604
    %v1693 = vpack.c.b16 %v1607, %v1605
    %v1694 = vpack.c.b16 %v1610, %v1608
    %v1695 = vpack.c.b16 %v1611, %v1609
    %v1696 = vpack.c.b16 %v1614, %v1612
    %v1697 = vpack.c.b16 %v1615, %v1613
    %v1698 = vpack.c.b16 %v1618, %v1616
    %v1699 = vpack.c.b16 %v1619, %v1617
    %v1700 = vpack.c.b16 %v1622, %v1620
    %v1701 = vpack.c.b16 %v1623, %v1621
    %v1702 = vpack.c.b16 %v1626, %v1624
    %v1703 = vpack.c.b16 %v1627, %v1625
    %v1704 = vpack.c.b16 %v1630, %v1628
    %v1705 = vpack.c.b16 %v1631, %v1629
    %v1706 = vpack.c.b16 %v1634, %v1632
    %v1707 = vpack.c.b16 %v1635, %v1633
    %v1708 = vpack.c.b16 %v1638, %v1636
    %v1709 = vpack.c.b16 %v1639, %v1637
    %v1710 = vpack.c.b16 %v1642, %v1640
    %v1711 = vpack.c.b16 %v1643, %v1641
    %v1712 = vpack.c.b16 %v1646, %v1644
    %v1713 = vpack.c.b16 %v1647, %v1645
    %v1714 = vpack.c.b16 %v1650, %v1648
    %v1715 = vpack.c.b16 %v1651, %v1649
    %1780 = vmatpush.bf16.msra.mxu0 %v1666
    %1781 = vmatpush.bf16.msra.mxu0 %v1664
    %1782 = vmatpush.bf16.msra.mxu0 %v1662
    %1783 = vmatpush.bf16.msra.mxu0 %v1660
    %1784 = vmatpush.bf16.msra.mxu0 %v1658
    %1785 = vmatpush.bf16.msra.mxu0 %v1656
    %1786 = vmatpush.bf16.msra.mxu0 %v1654
    %1787 = vmatpush.bf16.msra.mxu0 %v1652
    %1788 = vmatmul.bf16.gmra.mxu0 %v1386
    %v1789 = vpop.f32.mrf.mxu0
    %v1790 = vadd.f32 %v1456, %v1789
    %v1791 = vpop.f32.mrf.mxu0
    %1792 = vdwg.mxu0
    %1793 = vmatpush.bf16.msra.mxu0 %v1682
    %1794 = vmatpush.bf16.msra.mxu0 %v1680
    %1795 = vmatpush.bf16.msra.mxu0 %v1678
    %1796 = vmatpush.bf16.msra.mxu0 %v1676
    %1797 = vmatpush.bf16.msra.mxu0 %v1674
    %1798 = vmatpush.bf16.msra.mxu0 %v1672
    %1799 = vmatpush.bf16.msra.mxu0 %v1670
    %1800 = vmatpush.bf16.msra.mxu0 %v1668
    %1801 = vmatmul.bf16.gmra.mxu0 %v1387
    %v1802 = vpop.f32.mrf.mxu0
    %v1803 = vadd.f32 %v1790, %v1802
    %v1804 = vpop.f32.mrf.mxu0
    %1805 = vdwg.mxu0
    %1806 = vmatpush.bf16.msra.mxu0 %v1698
    %1807 = vmatpush.bf16.msra.mxu0 %v1696
    %1808 = vmatpush.bf16.msra.mxu0 %v1694
    %1809 = vmatpush.bf16.msra.mxu0 %v1692
    %1810 = vmatpush.bf16.msra.mxu0 %v1690
    %1811 = vmatpush.bf16.msra.mxu0 %v1688
    %1812 = vmatpush.bf16.msra.mxu0 %v1686
    %1813 = vmatpush.bf16.msra.mxu0 %v1684
    %1814 = vmatmul.bf16.gmra.mxu0 %v1388
    %v1815 = vpop.f32.mrf.mxu0
    %v1816 = vadd.f32 %v1803, %v1815
    %v1817 = vpop.f32.mrf.mxu0
    %1818 = vdwg.mxu0
    %1819 = vmatpush.bf16.msra.mxu0 %v1714
    %1820 = vmatpush.bf16.msra.mxu0 %v1712
    %1821 = vmatpush.bf16.msra.mxu0 %v1710
    %1822 = vmatpush.bf16.msra.mxu0 %v1708
    %1823 = vmatpush.bf16.msra.mxu0 %v1706
    %1824 = vmatpush.bf16.msra.mxu0 %v1704
    %1825 = vmatpush.bf16.msra.mxu0 %v1702
    %1826 = vmatpush.bf16.msra.mxu0 %v1700
    %1827 = vmatmul.bf16.gmra.mxu0 %v1389
    %v1828 = vpop.f32.mrf.mxu0
    %v1829 = vadd.f32 %v1816, %v1828
    %v1830 = vpop.f32.mrf.mxu0
    %1831 = vdwg.mxu0
    %1832 = vmatpush.bf16.msra.mxu0 %v1667
    %1833 = vmatpush.bf16.msra.mxu0 %v1665
    %1834 = vmatpush.bf16.msra.mxu0 %v1663
    %1835 = vmatpush.bf16.msra.mxu0 %v1661
    %1836 = vmatpush.bf16.msra.mxu0 %v1659
    %1837 = vmatpush.bf16.msra.mxu0 %v1657
    %1838 = vmatpush.bf16.msra.mxu0 %v1655
    %1839 = vmatpush.bf16.msra.mxu0 %v1653
    %1840 = vmatmul.bf16.gmra.mxu0 %v1386
    %v1841 = vpop.f32.mrf.mxu0
    %v1842 = vadd.f32 %v1457, %v1841
    %v1843 = vpop.f32.mrf.mxu0
    %1844 = vdwg.mxu0
    %1845 = vmatpush.bf16.msra.mxu0 %v1683
    %1846 = vmatpush.bf16.msra.mxu0 %v1681
    %1847 = vmatpush.bf16.msra.mxu0 %v1679
    %1848 = vmatpush.bf16.msra.mxu0 %v1677
    %1849 = vmatpush.bf16.msra.mxu0 %v1675
    %1850 = vmatpush.bf16.msra.mxu0 %v1673
    %1851 = vmatpush.bf16.msra.mxu0 %v1671
    %1852 = vmatpush.bf16.msra.mxu0 %v1669
    %1853 = vmatmul.bf16.gmra.mxu0 %v1387
    %v1854 = vpop.f32.mrf.mxu0
    %v1855 = vadd.f32 %v1842, %v1854
    %v1856 = vpop.f32.mrf.mxu0
    %1857 = vdwg.mxu0
    %1858 = vmatpush.bf16.msra.mxu0 %v1699
    %1859 = vmatpush.bf16.msra.mxu0 %v1697
    %1860 = vmatpush.bf16.msra.mxu0 %v1695
    %1861 = vmatpush.bf16.msra.mxu0 %v1693
    %1862 = vmatpush.bf16.msra.mxu0 %v1691
    %1863 = vmatpush.bf16.msra.mxu0 %v1689
    %1864 = vmatpush.bf16.msra.mxu0 %v1687
    %1865 = vmatpush.bf16.msra.mxu0 %v1685
    %1866 = vmatmul.bf16.gmra.mxu0 %v1388
    %v1867 = vpop.f32.mrf.mxu0
    %v1868 = vadd.f32 %v1855, %v1867
    %v1869 = vpop.f32.mrf.mxu0
    %1870 = vdwg.mxu0
    %1871 = vmatpush.bf16.msra.mxu0 %v1715
    %1872 = vmatpush.bf16.msra.mxu0 %v1713
    %1873 = vmatpush.bf16.msra.mxu0 %v1711
    %1874 = vmatpush.bf16.msra.mxu0 %v1709
    %1875 = vmatpush.bf16.msra.mxu0 %v1707
    %1876 = vmatpush.bf16.msra.mxu0 %v1705
    %1877 = vmatpush.bf16.msra.mxu0 %v1703
    %1878 = vmatpush.bf16.msra.mxu0 %v1701
    %1879 = vmatmul.bf16.gmra.mxu0 %v1389
    %v1880 = vpop.f32.mrf.mxu0
    %v1881 = vadd.f32 %v1868, %v1880
    %v1882 = vpop.f32.mrf.mxu0
    %1883 = vdwg.mxu0
    %v1884 = vmax.f32 %v1829, 0.0
    %v1885 = vmax.f32 %v1881, 0.0
    %v1886 = vpack.c.bf16 %v1884, %v1884
    %v1887 = vpack.c.bf16 %v1885, %v1885
    %v1888 = vld [vmem:[#allocation10] sm:$0xf]
    %v1889 = vld [vmem:[#allocation10 + $0x4] sm:$0xf]
    %v1890 = vld [vmem:[#allocation10 + $0x8] sm:$0xf]
    %v1891 = vld [vmem:[#allocation10 + $0xc] sm:$0xf]
    %v1892 = vld [vmem:[#allocation10 + $0x10] sm:$0xf]
    %v1893 = vld [vmem:[#allocation10 + $0x14] sm:$0xf]
    %v1894 = vld [vmem:[#allocation10 + $0x18] sm:$0xf]
    %v1895 = vld [vmem:[#allocation10 + $0x1c] sm:$0xf]
    %v1896 = vld [vmem:[#allocation10 + $0x20] sm:$0xf]
    %v1897 = vld [vmem:[#allocation10 + $0x24] sm:$0xf]
    %v1898 = vld [vmem:[#allocation10 + $0x28] sm:$0xf]
    %v1899 = vld [vmem:[#allocation10 + $0x2c] sm:$0xf]
    %v1900 = vld [vmem:[#allocation10 + $0x30] sm:$0xf]
    %v1901 = vld [vmem:[#allocation10 + $0x34] sm:$0xf]
    %v1902 = vld [vmem:[#allocation10 + $0x38] sm:$0xf]
    %v1903 = vld [vmem:[#allocation10 + $0x3c] sm:$0xf]
    %v1904 = vld [vmem:[#allocation10 + $0x40] sm:$0xf]
    %v1905 = vld [vmem:[#allocation10 + $0x44] sm:$0xf]
    %v1906 = vld [vmem:[#allocation10 + $0x48] sm:$0xf]
    %v1907 = vld [vmem:[#allocation10 + $0x4c] sm:$0xf]
    %v1908 = vld [vmem:[#allocation10 + $0x50] sm:$0xf]
    %v1909 = vld [vmem:[#allocation10 + $0x54] sm:$0xf]
    %v1910 = vld [vmem:[#allocation10 + $0x58] sm:$0xf]
    %v1911 = vld [vmem:[#allocation10 + $0x5c] sm:$0xf]
    %v1912 = vld [vmem:[#allocation10 + $0x60] sm:$0xf]
    %v1913 = vld [vmem:[#allocation10 + $0x64] sm:$0xf]
    %v1914 = vld [vmem:[#allocation10 + $0x68] sm:$0xf]
    %v1915 = vld [vmem:[#allocation10 + $0x6c] sm:$0xf]
    %v1916 = vld [vmem:[#allocation10 + $0x70] sm:$0xf]
    %v1917 = vld [vmem:[#allocation10 + $0x74] sm:$0xf]
    %v1918 = vld [vmem:[#allocation10 + $0x78] sm:$0xf]
    %v1919 = vld [vmem:[#allocation10 + $0x7c] sm:$0xf]
    %v1920 = vld [vmem:[#allocation13 + $0xa] sm:$0x1]
    %v1922 = vperm.slane %v1920, 0
    %v1956 = vunpack.c.l.b16 %v1888
    %v1957 = vunpack.c.l.b16 %v1889
    %v1958 = vunpack.c.l.b16 %v1890
    %v1959 = vunpack.c.l.b16 %v1891
    %v1960 = vunpack.c.l.b16 %v1892
    %v1961 = vunpack.c.l.b16 %v1893
    %v1962 = vunpack.c.l.b16 %v1894
    %v1963 = vunpack.c.l.b16 %v1895
    %v1964 = vunpack.c.l.b16 %v1896
    %v1965 = vunpack.c.l.b16 %v1897
    %v1966 = vunpack.c.l.b16 %v1898
    %v1967 = vunpack.c.l.b16 %v1899
    %v1968 = vunpack.c.l.b16 %v1900
    %v1969 = vunpack.c.l.b16 %v1901
    %v1970 = vunpack.c.l.b16 %v1902
    %v1971 = vunpack.c.l.b16 %v1903
    %v1972 = vunpack.c.l.b16 %v1904
    %v1973 = vunpack.c.l.b16 %v1905
    %v1974 = vunpack.c.l.b16 %v1906
    %v1975 = vunpack.c.l.b16 %v1907
    %v1976 = vunpack.c.l.b16 %v1908
    %v1977 = vunpack.c.l.b16 %v1909
    %v1978 = vunpack.c.l.b16 %v1910
    %v1979 = vunpack.c.l.b16 %v1911
    %v1980 = vunpack.c.l.b16 %v1912
    %v1981 = vunpack.c.l.b16 %v1913
    %v1982 = vunpack.c.l.b16 %v1914
    %v1983 = vunpack.c.l.b16 %v1915
    %v1984 = vunpack.c.l.b16 %v1916
    %v1985 = vunpack.c.l.b16 %v1917
    %v1986 = vunpack.c.l.b16 %v1918
    %v1987 = vunpack.c.l.b16 %v1919
    %v1988 = vpack.c.b16 %v1957, %v1956
    %v1989 = vpack.c.b16 %v1959, %v1958
    %v1990 = vpack.c.b16 %v1961, %v1960
    %v1991 = vpack.c.b16 %v1963, %v1962
    %v1992 = vpack.c.b16 %v1965, %v1964
    %v1993 = vpack.c.b16 %v1967, %v1966
    %v1994 = vpack.c.b16 %v1969, %v1968
    %v1995 = vpack.c.b16 %v1971, %v1970
    %v1996 = vpack.c.b16 %v1973, %v1972
    %v1997 = vpack.c.b16 %v1975, %v1974
    %v1998 = vpack.c.b16 %v1977, %v1976
    %v1999 = vpack.c.b16 %v1979, %v1978
    %v2000 = vpack.c.b16 %v1981, %v1980
    %v2001 = vpack.c.b16 %v1983, %v1982
    %v2002 = vpack.c.b16 %v1985, %v1984
    %v2003 = vpack.c.b16 %v1987, %v1986
    %2020 = vmatpush.bf16.msra.mxu0 %v1995
    %2021 = vmatpush.bf16.msra.mxu0 %v1994
    %2022 = vmatpush.bf16.msra.mxu0 %v1993
    %2023 = vmatpush.bf16.msra.mxu0 %v1992
    %2024 = vmatpush.bf16.msra.mxu0 %v1991
    %2025 = vmatpush.bf16.msra.mxu0 %v1990
    %2026 = vmatpush.bf16.msra.mxu0 %v1989
    %2027 = vmatpush.bf16.msra.mxu0 %v1988
    %2028 = vmatmul.bf16.gmra.mxu0 %v1886
    %v2029 = vpop.f32.mrf.mxu0
    %v2030 = vadd.f32 %v1922, %v2029
    %v2031 = vpop.f32.mrf.mxu0
    %2032 = vdwg.mxu0
    %2033 = vmatpush.bf16.msra.mxu0 %v2003
    %2034 = vmatpush.bf16.msra.mxu0 %v2002
    %2035 = vmatpush.bf16.msra.mxu0 %v2001
    %2036 = vmatpush.bf16.msra.mxu0 %v2000
    %2037 = vmatpush.bf16.msra.mxu0 %v1999
    %2038 = vmatpush.bf16.msra.mxu0 %v1998
    %2039 = vmatpush.bf16.msra.mxu0 %v1997
    %2040 = vmatpush.bf16.msra.mxu0 %v1996
    %2041 = vmatmul.bf16.gmra.mxu0 %v1887
    %v2042 = vpop.f32.mrf.mxu0
    %v2043 = vadd.f32 %v2030, %v2042
    %v2044 = vpop.f32.mrf.mxu0
    %2045 = vdwg.mxu0
    %v2046 = vmax.f32 %v2043, 0.0
    %v2047 = vpack.c.bf16 %v2046, %v2046
    %v2048 = vld [vmem:[#allocation11] sm:$0xf]
    %v2049 = vld [vmem:[#allocation11 + $0x4] sm:$0xf]
    %v2050 = vld [vmem:[#allocation11 + $0x8] sm:$0xf]
    %v2051 = vld [vmem:[#allocation11 + $0xc] sm:$0xf]
    %v2052 = vld [vmem:[#allocation11 + $0x10] sm:$0xf]
    %v2053 = vld [vmem:[#allocation11 + $0x14] sm:$0xf]
    %v2054 = vld [vmem:[#allocation11 + $0x18] sm:$0xf]
    %v2055 = vld [vmem:[#allocation11 + $0x1c] sm:$0xf]
    %v2056 = vld [vmem:[#allocation11 + $0x20] sm:$0xf]
    %v2057 = vld [vmem:[#allocation11 + $0x24] sm:$0xf]
    %v2058 = vld [vmem:[#allocation11 + $0x28] sm:$0xf]
    %v2059 = vld [vmem:[#allocation11 + $0x2c] sm:$0xf]
    %v2060 = vld [vmem:[#allocation11 + $0x30] sm:$0xf]
    %v2061 = vld [vmem:[#allocation11 + $0x34] sm:$0xf]
    %v2062 = vld [vmem:[#allocation11 + $0x38] sm:$0xf]
    %v2063 = vld [vmem:[#allocation11 + $0x3c] sm:$0xf]
    %v2064 = vld [vmem:[#allocation13 + $0xb] sm:$0x1]
    %v2066 = vperm.slane %v2064, 0
    %v2084 = vunpack.c.l.b16 %v2048
    %v2085 = vunpack.c.l.b16 %v2049
    %v2086 = vunpack.c.l.b16 %v2050
    %v2087 = vunpack.c.l.b16 %v2051
    %v2088 = vunpack.c.l.b16 %v2052
    %v2089 = vunpack.c.l.b16 %v2053
    %v2090 = vunpack.c.l.b16 %v2054
    %v2091 = vunpack.c.l.b16 %v2055
    %v2092 = vunpack.c.l.b16 %v2056
    %v2093 = vunpack.c.l.b16 %v2057
    %v2094 = vunpack.c.l.b16 %v2058
    %v2095 = vunpack.c.l.b16 %v2059
    %v2096 = vunpack.c.l.b16 %v2060
    %v2097 = vunpack.c.l.b16 %v2061
    %v2098 = vunpack.c.l.b16 %v2062
    %v2099 = vunpack.c.l.b16 %v2063
    %v2100 = vpack.c.b16 %v2085, %v2084
    %v2101 = vpack.c.b16 %v2087, %v2086
    %v2102 = vpack.c.b16 %v2089, %v2088
    %v2103 = vpack.c.b16 %v2091, %v2090
    %v2104 = vpack.c.b16 %v2093, %v2092
    %v2105 = vpack.c.b16 %v2095, %v2094
    %v2106 = vpack.c.b16 %v2097, %v2096
    %v2107 = vpack.c.b16 %v2099, %v2098
    %2116 = vmatpush.bf16.msra.mxu0 %v2107
    %2117 = vmatpush.bf16.msra.mxu0 %v2106
    %2118 = vmatpush.bf16.msra.mxu0 %v2105
    %2119 = vmatpush.bf16.msra.mxu0 %v2104
    %2120 = vmatpush.bf16.msra.mxu0 %v2103
    %2121 = vmatpush.bf16.msra.mxu0 %v2102
    %2122 = vmatpush.bf16.msra.mxu0 %v2101
    %2123 = vmatpush.bf16.msra.mxu0 %v2100
    %2124 = vmatmul.bf16.gmra.mxu0 %v2047
    %v2125 = vpop.f32.mrf.mxu0
    %v2126 = vadd.f32 %v2066, %v2125
    %v2127 = vpop.f32.mrf.mxu0
    %2128 = vdwg.mxu0
    %2129 = vst [vmem:[#allocation14] sm:$0xff] %v2126
    // Predicated region
    $region58: #{tpu_custom_call.1} parent=1 // pred_check
      _
    $region59: #{tpu_custom_call.1} parent=1 // pred_check_branch
      %2131 = sbr.rel (0) target = $region61
    $region60: #{tpu_custom_call.1} parent=1 // pred_region
      %2133 = vsyncadd [#allocation4], 0
      %s2135 = sshll.u32 [#allocation14], 4
      %s2136 = int_to_ptr.vmem [resolvable:$true] %s2135
      %s2137 = sshll.u32 %s7, 4
      %s2138 = int_to_ptr.hbm [resolvable:$true] %s2137
      %2140 = dma.vmem_to_hbm [thread:$0]  %s2136, 128, %s2138, [#allocation4]
    $region61: #{tpu_custom_call.1} parent=1 // pred_fallthru
      _
    // Predicated region
    $region62: #{tpu_custom_call.1} parent=1 // pred_check
      _
    $region63: #{tpu_custom_call.1} parent=1 // pred_check_branch
      %2142 = sbr.rel (0) target = $region65
    $region64: #{tpu_custom_call.1} parent=1 // pred_region
      %2144 = dma.done [#allocation4], 128
    $region65: #{tpu_custom_call.1} parent=1 // pred_fallthru
      _
    %2145 = vsyncpa [#allocation3], 1
    %2146 = vsyncpa [#allocation6], 1
    %2147 = vsyncpa [#allocation9], 1
    %2148 = vsyncpa [#allocation12], 1
    %2149 = vsyncpa [#allocation4], 1

</llo_original>
